<compile_context>
chip_gen: v7x
topology: tpu7x:2x2x1
jax: 0.10.0
libtpu: 0.0.40
codegen_flags: <defaults>
</compile_context>

<pallas_src>
import jax
import jax.numpy as jnp
import numpy as np
from jax.experimental import pallas as pl
from jax.experimental.pallas import tpu as pltpu


def nade_kernel(x_ref, c_ref, wt_ref, b_ref, v_ref, p_ref, a_ref):
    """One grid step == one (batch block, chunk of T autoregressive steps).

    x_ref : (1, 1, TB, T)    x values for this batch block / chunk
    c_ref : (1, H)           c^T (constant, resident)
    wt_ref: (1, T, H)        W[:, chunk]^T rows
    b_ref : (1, T, C)        b[chunk] rows
    v_ref : (T, C, H)        V[chunk], lane-dense (H last)
    p_ref : (1, 1, T, TB, C) output block for this (batch block, chunk)
    a_ref : (TB, H)          VMEM scratch carrying the hidden pre-activation
    """
    chunk = pl.program_id(1)
    T, C, _ = v_ref.shape

    # (Re-)initialize the carried accumulator at the start of each batch block.
    @pl.when(chunk == 0)
    def _():
        a_ref[...] = jnp.broadcast_to(c_ref[...], a_ref.shape)

    a = a_ref[...]              # (TB, H) -- stays in vregs for the whole chunk
    xb = x_ref[0, 0]            # (TB, T)
    wtb = wt_ref[0]             # (T, H)
    bvals = b_ref[0]            # (T, C)

    for t in range(T):          # static unroll: every slice below is static
        h = jax.nn.sigmoid(a)                               # (TB, H)
        # logits = h @ V[i] + b[i]; V[i] stored transposed as (C, H).
        logits = jax.lax.dot_general(
            h, v_ref[t],
            dimension_numbers=(((1,), (1,)), ((), ())),
            preferred_element_type=jnp.float32,
        ) + bvals[t][None, :]                               # (TB, C)
        # softmax over the C classes
        m = jnp.max(logits, axis=-1, keepdims=True)
        e = jnp.exp(logits - m)
        p_ref[0, 0, t] = e / jnp.sum(e, axis=-1, keepdims=True)
        # a <- a + x[:, i] * W[:, i]^T   (outer product via broadcast)
        a = a + xb[:, t][:, None] * wtb[t][None, :]

    a_ref[...] = a


def _pick_batch_block(batch):
    """Largest sublane-aligned block that still yields >= 2 batch blocks
    (so multi-TensorCore chips get parallel work); otherwise one block."""
    for tb in (256, 128, 64, 32, 16, 8):
        if batch % tb == 0 and batch // tb >= 2:
            return tb
    return batch


def nade_forward(x, W, c, V, b, *, step_chunk=8):
    """Pallas NADE forward. Returns p_hat with shape (B, 10, D) (PyTorch layout)."""
    orig_shape = x.shape
    if x.ndim > 2:
        x = x.reshape(orig_shape[0], -1)
    x = x.astype(jnp.float32)
    B = x.shape[0]
    H, D = W.shape
    C = b.shape[-1]

    T = min(step_chunk, D)          # autoregressive steps per grid iteration
    NC = -(-D // T)                 # number of D chunks
    D_pad = NC * T
    TB = _pick_batch_block(B)
    NB = B // TB

    # Lay parameters out so every per-chunk block is contiguous and every
    # in-kernel slice is static. Pad the D axis with zeros (padded steps add
    # 0 * 0 to `a`, so the recurrence is unaffected; their outputs are sliced off).
    Wt = jnp.transpose(W).astype(jnp.float32)                 # (D, H)
    Vt = jnp.transpose(V, (0, 2, 1)).astype(jnp.float32)      # (D, C, H) lane-dense
    bf = b.astype(jnp.float32)                                # (D, C)
    if D_pad > D:
        pad = D_pad - D
        x = jnp.pad(x, ((0, 0), (0, pad)))
        Wt = jnp.pad(Wt, ((0, pad), (0, 0)))
        Vt = jnp.pad(Vt, ((0, pad), (0, 0), (0, 0)))
        bf = jnp.pad(bf, ((0, pad), (0, 0)))

    x4 = x.reshape(NB, TB, NC, T).transpose(0, 2, 1, 3)       # (NB, NC, TB, T)
    wt3 = Wt.reshape(NC, T, H)                                 # (NC, T, H)
    b3 = bf.reshape(NC, T, C)                                  # (NC, T, C)
    c2 = jnp.transpose(c).astype(jnp.float32)                  # (1, H)

    out = pl.pallas_call(
        nade_kernel,
        out_shape=jax.ShapeDtypeStruct((NB, NC, T, TB, C), jnp.float32),
        grid_spec=pltpu.PrefetchScalarGridSpec(
            num_scalar_prefetch=0,
            grid=(NB, NC),
            in_specs=[
                pl.BlockSpec((1, 1, TB, T), lambda bb, i: (bb, i, 0, 0)),  # x chunk
                pl.BlockSpec((1, H), lambda bb, i: (0, 0)),                # c^T (resident)
                pl.BlockSpec((1, T, H), lambda bb, i: (i, 0, 0)),          # W^T chunk
                pl.BlockSpec((1, T, C), lambda bb, i: (i, 0, 0)),          # b chunk
                pl.BlockSpec((T, C, H), lambda bb, i: (i, 0, 0)),          # V chunk (lane-dense)
            ],
            out_specs=pl.BlockSpec((1, 1, T, TB, C),
                                   lambda bb, i: (bb, i, 0, 0, 0)),
            scratch_shapes=[pltpu.VMEM((TB, H), jnp.float32)],  # carried `a`
        ),
        compiler_params=pltpu.CompilerParams(
            # Batch blocks are independent (megacore-parallel); the chunk axis
            # is a sequential recurrence over `a`.
            dimension_semantics=("parallel", "arbitrary"),
        ),
    )(x4, c2, wt3, b3, Vt)

    # (NB, NC, T, TB, C) -> (B, C, D): PyTorch's stack(p_i, dim=2) layout.
    out = out.transpose(0, 3, 4, 1, 2).reshape(B, C, D_pad)
    return out[:, :, :D]


def nade_reference(x, W, c, V, b):
    """Pure-JAX reference mirroring the PyTorch loop (for correctness check)."""
    if x.ndim > 2:
        x = x.reshape(x.shape[0], -1)
    x = x.astype(jnp.float32)
    B = x.shape[0]
    H, D = W.shape
    a = jnp.broadcast_to(jnp.transpose(c), (B, H))
    ps = []
    for i in range(D):
        h = jax.nn.sigmoid(a)
        p_i = jax.nn.softmax(h @ V[i] + b[i], axis=1)
        ps.append(p_i)
        a = a + x[:, i:i + 1] * W[:, i][None, :]
    return jnp.stack(ps, axis=2)


if __name__ == "__main__":
    batch, hidden_dim = 8, 32
    # x is image-like (B, 1, 4, 4) -> flattened input_dim = 16
    input_dim = 16

    key = jax.random.PRNGKey(0)
    k_w, k_v, k_x = jax.random.split(key, 3)

    # Deterministic param init (kaiming_normal_-style std for W and V; c, b zero).
    W = jax.random.normal(k_w, (hidden_dim, input_dim), jnp.float32) * jnp.sqrt(2.0 / input_dim)
    V = jax.random.normal(k_v, (input_dim, hidden_dim, 10), jnp.float32) * jnp.sqrt(2.0 / (hidden_dim * 10))
    c = jnp.zeros((hidden_dim, 1), jnp.float32)
    b = jnp.zeros((input_dim, 10), jnp.float32)

    # Non-negative "pixel" inputs (0..9) so the multinomial branch is never taken.
    x = jax.random.randint(k_x, (batch, 1, 4, 4), 0, 10).astype(jnp.float32)

    p_hat = jax.block_until_ready(nade_forward(x, W, c, V, b))
    p_ref = jax.block_until_ready(nade_reference(x, W, c, V, b))

    assert p_hat.shape == (batch, 10, input_dim), p_hat.shape
    np.testing.assert_allclose(np.asarray(p_hat), np.asarray(p_ref), rtol=1e-5, atol=1e-5)
    print("KERNEL_OK")
</pallas_src>

<mosaic_0001>
module attributes {stable_mosaic.version = 11 : i64} {
  func.func @nade_kernel(%arg0: i32, %arg1: i32, %arg2: memref<1x1x8x8xf32, #tpu.memory_space<vmem>>, %arg3: memref<1x32xf32, #tpu.memory_space<vmem>>, %arg4: memref<1x8x32xf32, #tpu.memory_space<vmem>>, %arg5: memref<1x8x10xf32, #tpu.memory_space<vmem>>, %arg6: memref<8x10x32xf32, #tpu.memory_space<vmem>>, %arg7: memref<1x1x8x8x10xf32, #tpu.memory_space<vmem>>, %arg8: memref<8x32xf32, #tpu.memory_space<vmem>>) attributes {dimension_semantics = [#tpu.dimension_semantics<parallel>, #tpu.dimension_semantics<arbitrary>], iteration_bounds = array<i64: 1, 2>, scalar_prefetch = 0 : i64, scratch_operands = 1 : i64, tpu.core_type = #tpu.core_type<tc>, window_params = [{transform_indices = @transform_0, window_bounds = array<i64: 1, 1, 8, 8>}, {pipeline_mode = #tpu.pipeline_mode<synchronous>, transform_indices = @transform_1, window_bounds = array<i64: 1, 32>}, {transform_indices = @transform_2, window_bounds = array<i64: 1, 8, 32>}, {transform_indices = @transform_3, window_bounds = array<i64: 1, 8, 10>}, {transform_indices = @transform_4, window_bounds = array<i64: 8, 10, 32>}, {transform_indices = @transform_5, window_bounds = array<i64: 1, 1, 8, 8, 10>}]} {
    %c0_i32 = arith.constant 0 : i32
    %0 = arith.cmpi eq, %arg1, %c0_i32 : i32
    %1 = arith.extui %0 : i1 to i32
    %c0_i32_0 = arith.constant 0 : i32
    %2 = arith.cmpi ne, %1, %c0_i32_0 : i32
    scf.if %2 {
      %c0_102 = arith.constant 0 : index
      %c0_103 = arith.constant 0 : index
      %291 = vector.load %arg3[%c0_102, %c0_103] : memref<1x32xf32, #tpu.memory_space<vmem>>, vector<1x32xf32>
      %292 = vector.shape_cast %291 : vector<1x32xf32> to vector<1x32xf32>
      %293 = vector.broadcast %292 : vector<1x32xf32> to vector<8x32xf32>
      %c0_104 = arith.constant 0 : index
      %c0_105 = arith.constant 0 : index
      %294 = vector.load %arg8[%c0_104, %c0_105] : memref<8x32xf32, #tpu.memory_space<vmem>>, vector<8x32xf32>
      tpu.vector_store %arg8[%c0_104, %c0_105], %293 {strides = array<i32>} : memref<8x32xf32, #tpu.memory_space<vmem>>, vector<8x32xf32>,
    } else {
    }
    %c0 = arith.constant 0 : index
    %c0_1 = arith.constant 0 : index
    %3 = vector.load %arg8[%c0, %c0_1] : memref<8x32xf32, #tpu.memory_space<vmem>>, vector<8x32xf32>
    %c0_2 = arith.constant 0 : index
    %c0_3 = arith.constant 0 : index
    %c0_4 = arith.constant 0 : index
    %c0_5 = arith.constant 0 : index
    %4 = vector.load %arg2[%c0_2, %c0_3, %c0_4, %c0_5] : memref<1x1x8x8xf32, #tpu.memory_space<vmem>>, vector<1x1x8x8xf32>
    %5 = vector.shape_cast %4 : vector<1x1x8x8xf32> to vector<8x8xf32>
    %c0_6 = arith.constant 0 : index
    %c0_7 = arith.constant 0 : index
    %c0_8 = arith.constant 0 : index
    %6 = vector.load %arg4[%c0_6, %c0_7, %c0_8] : memref<1x8x32xf32, #tpu.memory_space<vmem>>, vector<1x8x32xf32>
    %7 = vector.shape_cast %6 : vector<1x8x32xf32> to vector<8x32xf32>
    %c0_9 = arith.constant 0 : index
    %c0_10 = arith.constant 0 : index
    %c0_11 = arith.constant 0 : index
    %8 = vector.load %arg5[%c0_9, %c0_10, %c0_11] : memref<1x8x10xf32, #tpu.memory_space<vmem>>, vector<1x8x10xf32>
    %9 = vector.shape_cast %8 : vector<1x8x10xf32> to vector<8x10xf32>
    %10 = arith.negf %3 : vector<8x32xf32>
    %11 = math.exp %10 : vector<8x32xf32>
    %cst = arith.constant 1.000000e+00 : f32
    %12 = vector.broadcast %cst : f32 to vector<8x32xf32>
    %13 = arith.addf %12, %11 : vector<8x32xf32>
    %14 = arith.divf %12, %13 : vector<8x32xf32>
    %c0_12 = arith.constant 0 : index
    %c0_13 = arith.constant 0 : index
    %c0_14 = arith.constant 0 : index
    %15 = vector.load %arg6[%c0_12, %c0_13, %c0_14] : memref<8x10x32xf32, #tpu.memory_space<vmem>>, vector<1x10x32xf32>
    %16 = vector.shape_cast %15 : vector<1x10x32xf32> to vector<10x32xf32>
    %cst_15 = arith.constant dense<0.000000e+00> : vector<8x10xf32>
    %17 = tpu.matmul %14, %16, %cst_15 {dimension_numbers = #tpu.dot_dimension_numbers<[1], [1], [0], [0], [0, 0, 1, 0], [], []>} : vector<8x32xf32>, vector<10x32xf32>, vector<8x10xf32> -> vector<8x10xf32>
    %18 = vector.extract_strided_slice %9 {offsets = [0, 0], sizes = [1, 10], strides = [1, 1]} : vector<8x10xf32> to vector<1x10xf32>
    %19 = vector.shape_cast %18 : vector<1x10xf32> to vector<10xf32>
    %20 = vector.shape_cast %19 : vector<10xf32> to vector<1x10xf32>
    %21 = vector.broadcast %20 : vector<1x10xf32> to vector<8x10xf32>
    %22 = arith.addf %17, %21 : vector<8x10xf32>
    %cst_16 = arith.constant dense<0xFF800000> : vector<8xf32>
    %23 = vector.multi_reduction <maximumf>, %22, %cst_16 [1] : vector<8x10xf32> to vector<8xf32>
    %24 = vector.shape_cast %23 : vector<8xf32> to vector<8x1xf32>
    %25 = vector.broadcast %24 : vector<8x1xf32> to vector<8x10xf32>
    %26 = arith.subf %22, %25 : vector<8x10xf32>
    %27 = math.exp %26 : vector<8x10xf32>
    %cst_17 = arith.constant dense<0.000000e+00> : vector<8xf32>
    %28 = vector.multi_reduction <add>, %27, %cst_17 [1] : vector<8x10xf32> to vector<8xf32>
    %29 = vector.shape_cast %28 : vector<8xf32> to vector<8x1xf32>
    %30 = vector.broadcast %29 : vector<8x1xf32> to vector<8x10xf32>
    %31 = arith.divf %27, %30 : vector<8x10xf32>
    %c0_18 = arith.constant 0 : index
    %c0_19 = arith.constant 0 : index
    %c0_20 = arith.constant 0 : index
    %c0_21 = arith.constant 0 : index
    %c0_22 = arith.constant 0 : index
    %32 = vector.load %arg7[%c0_18, %c0_19, %c0_20, %c0_21, %c0_22] : memref<1x1x8x8x10xf32, #tpu.memory_space<vmem>>, vector<1x1x1x8x10xf32>
    %33 = vector.shape_cast %32 : vector<1x1x1x8x10xf32> to vector<8x10xf32>
    %34 = vector.shape_cast %31 : vector<8x10xf32> to vector<1x1x1x8x10xf32>
    tpu.vector_store %arg7[%c0_18, %c0_19, %c0_20, %c0_21, %c0_22], %34 {strides = array<i32>} : memref<1x1x8x8x10xf32, #tpu.memory_space<vmem>>, vector<1x1x1x8x10xf32>,
    %35 = vector.extract_strided_slice %5 {offsets = [0, 0], sizes = [8, 1], strides = [1, 1]} : vector<8x8xf32> to vector<8x1xf32>
    %36 = vector.shape_cast %35 : vector<8x1xf32> to vector<8xf32>
    %37 = vector.shape_cast %36 : vector<8xf32> to vector<8x1xf32>
    %38 = vector.extract_strided_slice %7 {offsets = [0, 0], sizes = [1, 32], strides = [1, 1]} : vector<8x32xf32> to vector<1x32xf32>
    %39 = vector.shape_cast %38 : vector<1x32xf32> to vector<32xf32>
    %40 = vector.shape_cast %39 : vector<32xf32> to vector<1x32xf32>
    %41 = vector.broadcast %37 : vector<8x1xf32> to vector<8x32xf32>
    %42 = vector.broadcast %40 : vector<1x32xf32> to vector<8x32xf32>
    %43 = arith.mulf %41, %42 : vector<8x32xf32>
    %44 = arith.addf %3, %43 : vector<8x32xf32>
    %45 = arith.negf %44 : vector<8x32xf32>
    %46 = math.exp %45 : vector<8x32xf32>
    %cst_23 = arith.constant 1.000000e+00 : f32
    %47 = vector.broadcast %cst_23 : f32 to vector<8x32xf32>
    %48 = arith.addf %47, %46 : vector<8x32xf32>
    %49 = arith.divf %47, %48 : vector<8x32xf32>
    %c1 = arith.constant 1 : index
    %c0_24 = arith.constant 0 : index
    %c0_25 = arith.constant 0 : index
    %50 = vector.load %arg6[%c1, %c0_24, %c0_25] : memref<8x10x32xf32, #tpu.memory_space<vmem>>, vector<1x10x32xf32>
    %51 = vector.shape_cast %50 : vector<1x10x32xf32> to vector<10x32xf32>
    %cst_26 = arith.constant dense<0.000000e+00> : vector<8x10xf32>
    %52 = tpu.matmul %49, %51, %cst_26 {dimension_numbers = #tpu.dot_dimension_numbers<[1], [1], [0], [0], [0, 0, 1, 0], [], []>} : vector<8x32xf32>, vector<10x32xf32>, vector<8x10xf32> -> vector<8x10xf32>
    %53 = vector.extract_strided_slice %9 {offsets = [1, 0], sizes = [1, 10], strides = [1, 1]} : vector<8x10xf32> to vector<1x10xf32>
    %54 = vector.shape_cast %53 : vector<1x10xf32> to vector<10xf32>
    %55 = vector.shape_cast %54 : vector<10xf32> to vector<1x10xf32>
    %56 = vector.broadcast %55 : vector<1x10xf32> to vector<8x10xf32>
    %57 = arith.addf %52, %56 : vector<8x10xf32>
    %cst_27 = arith.constant dense<0xFF800000> : vector<8xf32>
    %58 = vector.multi_reduction <maximumf>, %57, %cst_27 [1] : vector<8x10xf32> to vector<8xf32>
    %59 = vector.shape_cast %58 : vector<8xf32> to vector<8x1xf32>
    %60 = vector.broadcast %59 : vector<8x1xf32> to vector<8x10xf32>
    %61 = arith.subf %57, %60 : vector<8x10xf32>
    %62 = math.exp %61 : vector<8x10xf32>
    %cst_28 = arith.constant dense<0.000000e+00> : vector<8xf32>
    %63 = vector.multi_reduction <add>, %62, %cst_28 [1] : vector<8x10xf32> to vector<8xf32>
    %64 = vector.shape_cast %63 : vector<8xf32> to vector<8x1xf32>
    %65 = vector.broadcast %64 : vector<8x1xf32> to vector<8x10xf32>
    %66 = arith.divf %62, %65 : vector<8x10xf32>
    %c0_29 = arith.constant 0 : index
    %c0_30 = arith.constant 0 : index
    %c1_31 = arith.constant 1 : index
    %c0_32 = arith.constant 0 : index
    %c0_33 = arith.constant 0 : index
    %67 = vector.load %arg7[%c0_29, %c0_30, %c1_31, %c0_32, %c0_33] : memref<1x1x8x8x10xf32, #tpu.memory_space<vmem>>, vector<1x1x1x8x10xf32>
    %68 = vector.shape_cast %67 : vector<1x1x1x8x10xf32> to vector<8x10xf32>
    %69 = vector.shape_cast %66 : vector<8x10xf32> to vector<1x1x1x8x10xf32>
    tpu.vector_store %arg7[%c0_29, %c0_30, %c1_31, %c0_32, %c0_33], %69 {strides = array<i32>} : memref<1x1x8x8x10xf32, #tpu.memory_space<vmem>>, vector<1x1x1x8x10xf32>,
    %70 = vector.extract_strided_slice %5 {offsets = [0, 1], sizes = [8, 1], strides = [1, 1]} : vector<8x8xf32> to vector<8x1xf32>
    %71 = vector.shape_cast %70 : vector<8x1xf32> to vector<8xf32>
    %72 = vector.shape_cast %71 : vector<8xf32> to vector<8x1xf32>
    %73 = vector.extract_strided_slice %7 {offsets = [1, 0], sizes = [1, 32], strides = [1, 1]} : vector<8x32xf32> to vector<1x32xf32>
    %74 = vector.shape_cast %73 : vector<1x32xf32> to vector<32xf32>
    %75 = vector.shape_cast %74 : vector<32xf32> to vector<1x32xf32>
    %76 = vector.broadcast %72 : vector<8x1xf32> to vector<8x32xf32>
    %77 = vector.broadcast %75 : vector<1x32xf32> to vector<8x32xf32>
    %78 = arith.mulf %76, %77 : vector<8x32xf32>
    %79 = arith.addf %44, %78 : vector<8x32xf32>
    %80 = arith.negf %79 : vector<8x32xf32>
    %81 = math.exp %80 : vector<8x32xf32>
    %cst_34 = arith.constant 1.000000e+00 : f32
    %82 = vector.broadcast %cst_34 : f32 to vector<8x32xf32>
    %83 = arith.addf %82, %81 : vector<8x32xf32>
    %84 = arith.divf %82, %83 : vector<8x32xf32>
    %c2 = arith.constant 2 : index
    %c0_35 = arith.constant 0 : index
    %c0_36 = arith.constant 0 : index
    %85 = vector.load %arg6[%c2, %c0_35, %c0_36] : memref<8x10x32xf32, #tpu.memory_space<vmem>>, vector<1x10x32xf32>
    %86 = vector.shape_cast %85 : vector<1x10x32xf32> to vector<10x32xf32>
    %cst_37 = arith.constant dense<0.000000e+00> : vector<8x10xf32>
    %87 = tpu.matmul %84, %86, %cst_37 {dimension_numbers = #tpu.dot_dimension_numbers<[1], [1], [0], [0], [0, 0, 1, 0], [], []>} : vector<8x32xf32>, vector<10x32xf32>, vector<8x10xf32> -> vector<8x10xf32>
    %88 = vector.extract_strided_slice %9 {offsets = [2, 0], sizes = [1, 10], strides = [1, 1]} : vector<8x10xf32> to vector<1x10xf32>
    %89 = vector.shape_cast %88 : vector<1x10xf32> to vector<10xf32>
    %90 = vector.shape_cast %89 : vector<10xf32> to vector<1x10xf32>
    %91 = vector.broadcast %90 : vector<1x10xf32> to vector<8x10xf32>
    %92 = arith.addf %87, %91 : vector<8x10xf32>
    %cst_38 = arith.constant dense<0xFF800000> : vector<8xf32>
    %93 = vector.multi_reduction <maximumf>, %92, %cst_38 [1] : vector<8x10xf32> to vector<8xf32>
    %94 = vector.shape_cast %93 : vector<8xf32> to vector<8x1xf32>
    %95 = vector.broadcast %94 : vector<8x1xf32> to vector<8x10xf32>
    %96 = arith.subf %92, %95 : vector<8x10xf32>
    %97 = math.exp %96 : vector<8x10xf32>
    %cst_39 = arith.constant dense<0.000000e+00> : vector<8xf32>
    %98 = vector.multi_reduction <add>, %97, %cst_39 [1] : vector<8x10xf32> to vector<8xf32>
    %99 = vector.shape_cast %98 : vector<8xf32> to vector<8x1xf32>
    %100 = vector.broadcast %99 : vector<8x1xf32> to vector<8x10xf32>
    %101 = arith.divf %97, %100 : vector<8x10xf32>
    %c0_40 = arith.constant 0 : index
    %c0_41 = arith.constant 0 : index
    %c2_42 = arith.constant 2 : index
    %c0_43 = arith.constant 0 : index
    %c0_44 = arith.constant 0 : index
    %102 = vector.load %arg7[%c0_40, %c0_41, %c2_42, %c0_43, %c0_44] : memref<1x1x8x8x10xf32, #tpu.memory_space<vmem>>, vector<1x1x1x8x10xf32>
    %103 = vector.shape_cast %102 : vector<1x1x1x8x10xf32> to vector<8x10xf32>
    %104 = vector.shape_cast %101 : vector<8x10xf32> to vector<1x1x1x8x10xf32>
    tpu.vector_store %arg7[%c0_40, %c0_41, %c2_42, %c0_43, %c0_44], %104 {strides = array<i32>} : memref<1x1x8x8x10xf32, #tpu.memory_space<vmem>>, vector<1x1x1x8x10xf32>,
    %105 = vector.extract_strided_slice %5 {offsets = [0, 2], sizes = [8, 1], strides = [1, 1]} : vector<8x8xf32> to vector<8x1xf32>
    %106 = vector.shape_cast %105 : vector<8x1xf32> to vector<8xf32>
    %107 = vector.shape_cast %106 : vector<8xf32> to vector<8x1xf32>
    %108 = vector.extract_strided_slice %7 {offsets = [2, 0], sizes = [1, 32], strides = [1, 1]} : vector<8x32xf32> to vector<1x32xf32>
    %109 = vector.shape_cast %108 : vector<1x32xf32> to vector<32xf32>
    %110 = vector.shape_cast %109 : vector<32xf32> to vector<1x32xf32>
    %111 = vector.broadcast %107 : vector<8x1xf32> to vector<8x32xf32>
    %112 = vector.broadcast %110 : vector<1x32xf32> to vector<8x32xf32>
    %113 = arith.mulf %111, %112 : vector<8x32xf32>
    %114 = arith.addf %79, %113 : vector<8x32xf32>
    %115 = arith.negf %114 : vector<8x32xf32>
    %116 = math.exp %115 : vector<8x32xf32>
    %cst_45 = arith.constant 1.000000e+00 : f32
    %117 = vector.broadcast %cst_45 : f32 to vector<8x32xf32>
    %118 = arith.addf %117, %116 : vector<8x32xf32>
    %119 = arith.divf %117, %118 : vector<8x32xf32>
    %c3 = arith.constant 3 : index
    %c0_46 = arith.constant 0 : index
    %c0_47 = arith.constant 0 : index
    %120 = vector.load %arg6[%c3, %c0_46, %c0_47] : memref<8x10x32xf32, #tpu.memory_space<vmem>>, vector<1x10x32xf32>
    %121 = vector.shape_cast %120 : vector<1x10x32xf32> to vector<10x32xf32>
    %cst_48 = arith.constant dense<0.000000e+00> : vector<8x10xf32>
    %122 = tpu.matmul %119, %121, %cst_48 {dimension_numbers = #tpu.dot_dimension_numbers<[1], [1], [0], [0], [0, 0, 1, 0], [], []>} : vector<8x32xf32>, vector<10x32xf32>, vector<8x10xf32> -> vector<8x10xf32>
    %123 = vector.extract_strided_slice %9 {offsets = [3, 0], sizes = [1, 10], strides = [1, 1]} : vector<8x10xf32> to vector<1x10xf32>
    %124 = vector.shape_cast %123 : vector<1x10xf32> to vector<10xf32>
    %125 = vector.shape_cast %124 : vector<10xf32> to vector<1x10xf32>
    %126 = vector.broadcast %125 : vector<1x10xf32> to vector<8x10xf32>
    %127 = arith.addf %122, %126 : vector<8x10xf32>
    %cst_49 = arith.constant dense<0xFF800000> : vector<8xf32>
    %128 = vector.multi_reduction <maximumf>, %127, %cst_49 [1] : vector<8x10xf32> to vector<8xf32>
    %129 = vector.shape_cast %128 : vector<8xf32> to vector<8x1xf32>
    %130 = vector.broadcast %129 : vector<8x1xf32> to vector<8x10xf32>
    %131 = arith.subf %127, %130 : vector<8x10xf32>
    %132 = math.exp %131 : vector<8x10xf32>
    %cst_50 = arith.constant dense<0.000000e+00> : vector<8xf32>
    %133 = vector.multi_reduction <add>, %132, %cst_50 [1] : vector<8x10xf32> to vector<8xf32>
    %134 = vector.shape_cast %133 : vector<8xf32> to vector<8x1xf32>
    %135 = vector.broadcast %134 : vector<8x1xf32> to vector<8x10xf32>
    %136 = arith.divf %132, %135 : vector<8x10xf32>
    %c0_51 = arith.constant 0 : index
    %c0_52 = arith.constant 0 : index
    %c3_53 = arith.constant 3 : index
    %c0_54 = arith.constant 0 : index
    %c0_55 = arith.constant 0 : index
    %137 = vector.load %arg7[%c0_51, %c0_52, %c3_53, %c0_54, %c0_55] : memref<1x1x8x8x10xf32, #tpu.memory_space<vmem>>, vector<1x1x1x8x10xf32>
    %138 = vector.shape_cast %137 : vector<1x1x1x8x10xf32> to vector<8x10xf32>
    %139 = vector.shape_cast %136 : vector<8x10xf32> to vector<1x1x1x8x10xf32>
    tpu.vector_store %arg7[%c0_51, %c0_52, %c3_53, %c0_54, %c0_55], %139 {strides = array<i32>} : memref<1x1x8x8x10xf32, #tpu.memory_space<vmem>>, vector<1x1x1x8x10xf32>,
    %140 = vector.extract_strided_slice %5 {offsets = [0, 3], sizes = [8, 1], strides = [1, 1]} : vector<8x8xf32> to vector<8x1xf32>
    %141 = vector.shape_cast %140 : vector<8x1xf32> to vector<8xf32>
    %142 = vector.shape_cast %141 : vector<8xf32> to vector<8x1xf32>
    %143 = vector.extract_strided_slice %7 {offsets = [3, 0], sizes = [1, 32], strides = [1, 1]} : vector<8x32xf32> to vector<1x32xf32>
    %144 = vector.shape_cast %143 : vector<1x32xf32> to vector<32xf32>
    %145 = vector.shape_cast %144 : vector<32xf32> to vector<1x32xf32>
    %146 = vector.broadcast %142 : vector<8x1xf32> to vector<8x32xf32>
    %147 = vector.broadcast %145 : vector<1x32xf32> to vector<8x32xf32>
    %148 = arith.mulf %146, %147 : vector<8x32xf32>
    %149 = arith.addf %114, %148 : vector<8x32xf32>
    %150 = arith.negf %149 : vector<8x32xf32>
    %151 = math.exp %150 : vector<8x32xf32>
    %cst_56 = arith.constant 1.000000e+00 : f32
    %152 = vector.broadcast %cst_56 : f32 to vector<8x32xf32>
    %153 = arith.addf %152, %151 : vector<8x32xf32>
    %154 = arith.divf %152, %153 : vector<8x32xf32>
    %c4 = arith.constant 4 : index
    %c0_57 = arith.constant 0 : index
    %c0_58 = arith.constant 0 : index
    %155 = vector.load %arg6[%c4, %c0_57, %c0_58] : memref<8x10x32xf32, #tpu.memory_space<vmem>>, vector<1x10x32xf32>
    %156 = vector.shape_cast %155 : vector<1x10x32xf32> to vector<10x32xf32>
    %cst_59 = arith.constant dense<0.000000e+00> : vector<8x10xf32>
    %157 = tpu.matmul %154, %156, %cst_59 {dimension_numbers = #tpu.dot_dimension_numbers<[1], [1], [0], [0], [0, 0, 1, 0], [], []>} : vector<8x32xf32>, vector<10x32xf32>, vector<8x10xf32> -> vector<8x10xf32>
    %158 = vector.extract_strided_slice %9 {offsets = [4, 0], sizes = [1, 10], strides = [1, 1]} : vector<8x10xf32> to vector<1x10xf32>
    %159 = vector.shape_cast %158 : vector<1x10xf32> to vector<10xf32>
    %160 = vector.shape_cast %159 : vector<10xf32> to vector<1x10xf32>
    %161 = vector.broadcast %160 : vector<1x10xf32> to vector<8x10xf32>
    %162 = arith.addf %157, %161 : vector<8x10xf32>
    %cst_60 = arith.constant dense<0xFF800000> : vector<8xf32>
    %163 = vector.multi_reduction <maximumf>, %162, %cst_60 [1] : vector<8x10xf32> to vector<8xf32>
    %164 = vector.shape_cast %163 : vector<8xf32> to vector<8x1xf32>
    %165 = vector.broadcast %164 : vector<8x1xf32> to vector<8x10xf32>
    %166 = arith.subf %162, %165 : vector<8x10xf32>
    %167 = math.exp %166 : vector<8x10xf32>
    %cst_61 = arith.constant dense<0.000000e+00> : vector<8xf32>
    %168 = vector.multi_reduction <add>, %167, %cst_61 [1] : vector<8x10xf32> to vector<8xf32>
    %169 = vector.shape_cast %168 : vector<8xf32> to vector<8x1xf32>
    %170 = vector.broadcast %169 : vector<8x1xf32> to vector<8x10xf32>
    %171 = arith.divf %167, %170 : vector<8x10xf32>
    %c0_62 = arith.constant 0 : index
    %c0_63 = arith.constant 0 : index
    %c4_64 = arith.constant 4 : index
    %c0_65 = arith.constant 0 : index
    %c0_66 = arith.constant 0 : index
    %172 = vector.load %arg7[%c0_62, %c0_63, %c4_64, %c0_65, %c0_66] : memref<1x1x8x8x10xf32, #tpu.memory_space<vmem>>, vector<1x1x1x8x10xf32>
    %173 = vector.shape_cast %172 : vector<1x1x1x8x10xf32> to vector<8x10xf32>
    %174 = vector.shape_cast %171 : vector<8x10xf32> to vector<1x1x1x8x10xf32>
    tpu.vector_store %arg7[%c0_62, %c0_63, %c4_64, %c0_65, %c0_66], %174 {strides = array<i32>} : memref<1x1x8x8x10xf32, #tpu.memory_space<vmem>>, vector<1x1x1x8x10xf32>,
    %175 = vector.extract_strided_slice %5 {offsets = [0, 4], sizes = [8, 1], strides = [1, 1]} : vector<8x8xf32> to vector<8x1xf32>
    %176 = vector.shape_cast %175 : vector<8x1xf32> to vector<8xf32>
    %177 = vector.shape_cast %176 : vector<8xf32> to vector<8x1xf32>
    %178 = vector.extract_strided_slice %7 {offsets = [4, 0], sizes = [1, 32], strides = [1, 1]} : vector<8x32xf32> to vector<1x32xf32>
    %179 = vector.shape_cast %178 : vector<1x32xf32> to vector<32xf32>
    %180 = vector.shape_cast %179 : vector<32xf32> to vector<1x32xf32>
    %181 = vector.broadcast %177 : vector<8x1xf32> to vector<8x32xf32>
    %182 = vector.broadcast %180 : vector<1x32xf32> to vector<8x32xf32>
    %183 = arith.mulf %181, %182 : vector<8x32xf32>
    %184 = arith.addf %149, %183 : vector<8x32xf32>
    %185 = arith.negf %184 : vector<8x32xf32>
    %186 = math.exp %185 : vector<8x32xf32>
    %cst_67 = arith.constant 1.000000e+00 : f32
    %187 = vector.broadcast %cst_67 : f32 to vector<8x32xf32>
    %188 = arith.addf %187, %186 : vector<8x32xf32>
    %189 = arith.divf %187, %188 : vector<8x32xf32>
    %c5 = arith.constant 5 : index
    %c0_68 = arith.constant 0 : index
    %c0_69 = arith.constant 0 : index
    %190 = vector.load %arg6[%c5, %c0_68, %c0_69] : memref<8x10x32xf32, #tpu.memory_space<vmem>>, vector<1x10x32xf32>
    %191 = vector.shape_cast %190 : vector<1x10x32xf32> to vector<10x32xf32>
    %cst_70 = arith.constant dense<0.000000e+00> : vector<8x10xf32>
    %192 = tpu.matmul %189, %191, %cst_70 {dimension_numbers = #tpu.dot_dimension_numbers<[1], [1], [0], [0], [0, 0, 1, 0], [], []>} : vector<8x32xf32>, vector<10x32xf32>, vector<8x10xf32> -> vector<8x10xf32>
    %193 = vector.extract_strided_slice %9 {offsets = [5, 0], sizes = [1, 10], strides = [1, 1]} : vector<8x10xf32> to vector<1x10xf32>
    %194 = vector.shape_cast %193 : vector<1x10xf32> to vector<10xf32>
    %195 = vector.shape_cast %194 : vector<10xf32> to vector<1x10xf32>
    %196 = vector.broadcast %195 : vector<1x10xf32> to vector<8x10xf32>
    %197 = arith.addf %192, %196 : vector<8x10xf32>
    %cst_71 = arith.constant dense<0xFF800000> : vector<8xf32>
    %198 = vector.multi_reduction <maximumf>, %197, %cst_71 [1] : vector<8x10xf32> to vector<8xf32>
    %199 = vector.shape_cast %198 : vector<8xf32> to vector<8x1xf32>
    %200 = vector.broadcast %199 : vector<8x1xf32> to vector<8x10xf32>
    %201 = arith.subf %197, %200 : vector<8x10xf32>
    %202 = math.exp %201 : vector<8x10xf32>
    %cst_72 = arith.constant dense<0.000000e+00> : vector<8xf32>
    %203 = vector.multi_reduction <add>, %202, %cst_72 [1] : vector<8x10xf32> to vector<8xf32>
    %204 = vector.shape_cast %203 : vector<8xf32> to vector<8x1xf32>
    %205 = vector.broadcast %204 : vector<8x1xf32> to vector<8x10xf32>
    %206 = arith.divf %202, %205 : vector<8x10xf32>
    %c0_73 = arith.constant 0 : index
    %c0_74 = arith.constant 0 : index
    %c5_75 = arith.constant 5 : index
    %c0_76 = arith.constant 0 : index
    %c0_77 = arith.constant 0 : index
    %207 = vector.load %arg7[%c0_73, %c0_74, %c5_75, %c0_76, %c0_77] : memref<1x1x8x8x10xf32, #tpu.memory_space<vmem>>, vector<1x1x1x8x10xf32>
    %208 = vector.shape_cast %207 : vector<1x1x1x8x10xf32> to vector<8x10xf32>
    %209 = vector.shape_cast %206 : vector<8x10xf32> to vector<1x1x1x8x10xf32>
    tpu.vector_store %arg7[%c0_73, %c0_74, %c5_75, %c0_76, %c0_77], %209 {strides = array<i32>} : memref<1x1x8x8x10xf32, #tpu.memory_space<vmem>>, vector<1x1x1x8x10xf32>,
    %210 = vector.extract_strided_slice %5 {offsets = [0, 5], sizes = [8, 1], strides = [1, 1]} : vector<8x8xf32> to vector<8x1xf32>
    %211 = vector.shape_cast %210 : vector<8x1xf32> to vector<8xf32>
    %212 = vector.shape_cast %211 : vector<8xf32> to vector<8x1xf32>
    %213 = vector.extract_strided_slice %7 {offsets = [5, 0], sizes = [1, 32], strides = [1, 1]} : vector<8x32xf32> to vector<1x32xf32>
    %214 = vector.shape_cast %213 : vector<1x32xf32> to vector<32xf32>
    %215 = vector.shape_cast %214 : vector<32xf32> to vector<1x32xf32>
    %216 = vector.broadcast %212 : vector<8x1xf32> to vector<8x32xf32>
    %217 = vector.broadcast %215 : vector<1x32xf32> to vector<8x32xf32>
    %218 = arith.mulf %216, %217 : vector<8x32xf32>
    %219 = arith.addf %184, %218 : vector<8x32xf32>
    %220 = arith.negf %219 : vector<8x32xf32>
    %221 = math.exp %220 : vector<8x32xf32>
    %cst_78 = arith.constant 1.000000e+00 : f32
    %222 = vector.broadcast %cst_78 : f32 to vector<8x32xf32>
    %223 = arith.addf %222, %221 : vector<8x32xf32>
    %224 = arith.divf %222, %223 : vector<8x32xf32>
    %c6 = arith.constant 6 : index
    %c0_79 = arith.constant 0 : index
    %c0_80 = arith.constant 0 : index
    %225 = vector.load %arg6[%c6, %c0_79, %c0_80] : memref<8x10x32xf32, #tpu.memory_space<vmem>>, vector<1x10x32xf32>
    %226 = vector.shape_cast %225 : vector<1x10x32xf32> to vector<10x32xf32>
    %cst_81 = arith.constant dense<0.000000e+00> : vector<8x10xf32>
    %227 = tpu.matmul %224, %226, %cst_81 {dimension_numbers = #tpu.dot_dimension_numbers<[1], [1], [0], [0], [0, 0, 1, 0], [], []>} : vector<8x32xf32>, vector<10x32xf32>, vector<8x10xf32> -> vector<8x10xf32>
    %228 = vector.extract_strided_slice %9 {offsets = [6, 0], sizes = [1, 10], strides = [1, 1]} : vector<8x10xf32> to vector<1x10xf32>
    %229 = vector.shape_cast %228 : vector<1x10xf32> to vector<10xf32>
    %230 = vector.shape_cast %229 : vector<10xf32> to vector<1x10xf32>
    %231 = vector.broadcast %230 : vector<1x10xf32> to vector<8x10xf32>
    %232 = arith.addf %227, %231 : vector<8x10xf32>
    %cst_82 = arith.constant dense<0xFF800000> : vector<8xf32>
    %233 = vector.multi_reduction <maximumf>, %232, %cst_82 [1] : vector<8x10xf32> to vector<8xf32>
    %234 = vector.shape_cast %233 : vector<8xf32> to vector<8x1xf32>
    %235 = vector.broadcast %234 : vector<8x1xf32> to vector<8x10xf32>
    %236 = arith.subf %232, %235 : vector<8x10xf32>
    %237 = math.exp %236 : vector<8x10xf32>
    %cst_83 = arith.constant dense<0.000000e+00> : vector<8xf32>
    %238 = vector.multi_reduction <add>, %237, %cst_83 [1] : vector<8x10xf32> to vector<8xf32>
    %239 = vector.shape_cast %238 : vector<8xf32> to vector<8x1xf32>
    %240 = vector.broadcast %239 : vector<8x1xf32> to vector<8x10xf32>
    %241 = arith.divf %237, %240 : vector<8x10xf32>
    %c0_84 = arith.constant 0 : index
    %c0_85 = arith.constant 0 : index
    %c6_86 = arith.constant 6 : index
    %c0_87 = arith.constant 0 : index
    %c0_88 = arith.constant 0 : index
    %242 = vector.load %arg7[%c0_84, %c0_85, %c6_86, %c0_87, %c0_88] : memref<1x1x8x8x10xf32, #tpu.memory_space<vmem>>, vector<1x1x1x8x10xf32>
    %243 = vector.shape_cast %242 : vector<1x1x1x8x10xf32> to vector<8x10xf32>
    %244 = vector.shape_cast %241 : vector<8x10xf32> to vector<1x1x1x8x10xf32>
    tpu.vector_store %arg7[%c0_84, %c0_85, %c6_86, %c0_87, %c0_88], %244 {strides = array<i32>} : memref<1x1x8x8x10xf32, #tpu.memory_space<vmem>>, vector<1x1x1x8x10xf32>,
    %245 = vector.extract_strided_slice %5 {offsets = [0, 6], sizes = [8, 1], strides = [1, 1]} : vector<8x8xf32> to vector<8x1xf32>
    %246 = vector.shape_cast %245 : vector<8x1xf32> to vector<8xf32>
    %247 = vector.shape_cast %246 : vector<8xf32> to vector<8x1xf32>
    %248 = vector.extract_strided_slice %7 {offsets = [6, 0], sizes = [1, 32], strides = [1, 1]} : vector<8x32xf32> to vector<1x32xf32>
    %249 = vector.shape_cast %248 : vector<1x32xf32> to vector<32xf32>
    %250 = vector.shape_cast %249 : vector<32xf32> to vector<1x32xf32>
    %251 = vector.broadcast %247 : vector<8x1xf32> to vector<8x32xf32>
    %252 = vector.broadcast %250 : vector<1x32xf32> to vector<8x32xf32>
    %253 = arith.mulf %251, %252 : vector<8x32xf32>
    %254 = arith.addf %219, %253 : vector<8x32xf32>
    %255 = arith.negf %254 : vector<8x32xf32>
    %256 = math.exp %255 : vector<8x32xf32>
    %cst_89 = arith.constant 1.000000e+00 : f32
    %257 = vector.broadcast %cst_89 : f32 to vector<8x32xf32>
    %258 = arith.addf %257, %256 : vector<8x32xf32>
    %259 = arith.divf %257, %258 : vector<8x32xf32>
    %c7 = arith.constant 7 : index
    %c0_90 = arith.constant 0 : index
    %c0_91 = arith.constant 0 : index
    %260 = vector.load %arg6[%c7, %c0_90, %c0_91] : memref<8x10x32xf32, #tpu.memory_space<vmem>>, vector<1x10x32xf32>
    %261 = vector.shape_cast %260 : vector<1x10x32xf32> to vector<10x32xf32>
    %cst_92 = arith.constant dense<0.000000e+00> : vector<8x10xf32>
    %262 = tpu.matmul %259, %261, %cst_92 {dimension_numbers = #tpu.dot_dimension_numbers<[1], [1], [0], [0], [0, 0, 1, 0], [], []>} : vector<8x32xf32>, vector<10x32xf32>, vector<8x10xf32> -> vector<8x10xf32>
    %263 = vector.extract_strided_slice %9 {offsets = [7, 0], sizes = [1, 10], strides = [1, 1]} : vector<8x10xf32> to vector<1x10xf32>
    %264 = vector.shape_cast %263 : vector<1x10xf32> to vector<10xf32>
    %265 = vector.shape_cast %264 : vector<10xf32> to vector<1x10xf32>
    %266 = vector.broadcast %265 : vector<1x10xf32> to vector<8x10xf32>
    %267 = arith.addf %262, %266 : vector<8x10xf32>
    %cst_93 = arith.constant dense<0xFF800000> : vector<8xf32>
    %268 = vector.multi_reduction <maximumf>, %267, %cst_93 [1] : vector<8x10xf32> to vector<8xf32>
    %269 = vector.shape_cast %268 : vector<8xf32> to vector<8x1xf32>
    %270 = vector.broadcast %269 : vector<8x1xf32> to vector<8x10xf32>
    %271 = arith.subf %267, %270 : vector<8x10xf32>
    %272 = math.exp %271 : vector<8x10xf32>
    %cst_94 = arith.constant dense<0.000000e+00> : vector<8xf32>
    %273 = vector.multi_reduction <add>, %272, %cst_94 [1] : vector<8x10xf32> to vector<8xf32>
    %274 = vector.shape_cast %273 : vector<8xf32> to vector<8x1xf32>
    %275 = vector.broadcast %274 : vector<8x1xf32> to vector<8x10xf32>
    %276 = arith.divf %272, %275 : vector<8x10xf32>
    %c0_95 = arith.constant 0 : index
    %c0_96 = arith.constant 0 : index
    %c7_97 = arith.constant 7 : index
    %c0_98 = arith.constant 0 : index
    %c0_99 = arith.constant 0 : index
    %277 = vector.load %arg7[%c0_95, %c0_96, %c7_97, %c0_98, %c0_99] : memref<1x1x8x8x10xf32, #tpu.memory_space<vmem>>, vector<1x1x1x8x10xf32>
    %278 = vector.shape_cast %277 : vector<1x1x1x8x10xf32> to vector<8x10xf32>
    %279 = vector.shape_cast %276 : vector<8x10xf32> to vector<1x1x1x8x10xf32>
    tpu.vector_store %arg7[%c0_95, %c0_96, %c7_97, %c0_98, %c0_99], %279 {strides = array<i32>} : memref<1x1x8x8x10xf32, #tpu.memory_space<vmem>>, vector<1x1x1x8x10xf32>,
    %280 = vector.extract_strided_slice %5 {offsets = [0, 7], sizes = [8, 1], strides = [1, 1]} : vector<8x8xf32> to vector<8x1xf32>
    %281 = vector.shape_cast %280 : vector<8x1xf32> to vector<8xf32>
    %282 = vector.shape_cast %281 : vector<8xf32> to vector<8x1xf32>
    %283 = vector.extract_strided_slice %7 {offsets = [7, 0], sizes = [1, 32], strides = [1, 1]} : vector<8x32xf32> to vector<1x32xf32>
    %284 = vector.shape_cast %283 : vector<1x32xf32> to vector<32xf32>
    %285 = vector.shape_cast %284 : vector<32xf32> to vector<1x32xf32>
    %286 = vector.broadcast %282 : vector<8x1xf32> to vector<8x32xf32>
    %287 = vector.broadcast %285 : vector<1x32xf32> to vector<8x32xf32>
    %288 = arith.mulf %286, %287 : vector<8x32xf32>
    %289 = arith.addf %254, %288 : vector<8x32xf32>
    %c0_100 = arith.constant 0 : index
    %c0_101 = arith.constant 0 : index
    %290 = vector.load %arg8[%c0_100, %c0_101] : memref<8x32xf32, #tpu.memory_space<vmem>>, vector<8x32xf32>
    tpu.vector_store %arg8[%c0_100, %c0_101], %289 {strides = array<i32>} : memref<8x32xf32, #tpu.memory_space<vmem>>, vector<8x32xf32>,
    return
  }
  func.func @transform_0(%arg0: i32, %arg1: i32) -> (i32, i32, i32, i32) {
    %c0_i32 = arith.constant 0 : i32
    %c0_i32_0 = arith.constant 0 : i32
    %c0_i32_1 = arith.constant 0 : i32
    return %arg0, %arg1, %c0_i32, %c0_i32_0 : i32, i32, i32, i32
  }
  func.func @transform_1(%arg0: i32, %arg1: i32) -> (i32, i32) {
    %c0_i32 = arith.constant 0 : i32
    %c0_i32_0 = arith.constant 0 : i32
    %c0_i32_1 = arith.constant 0 : i32
    return %c0_i32, %c0_i32_0 : i32, i32
  }
  func.func @transform_2(%arg0: i32, %arg1: i32) -> (i32, i32, i32) {
    %c0_i32 = arith.constant 0 : i32
    %c0_i32_0 = arith.constant 0 : i32
    %c0_i32_1 = arith.constant 0 : i32
    return %arg1, %c0_i32, %c0_i32_0 : i32, i32, i32
  }
  func.func @transform_3(%arg0: i32, %arg1: i32) -> (i32, i32, i32) {
    %c0_i32 = arith.constant 0 : i32
    %c0_i32_0 = arith.constant 0 : i32
    %c0_i32_1 = arith.constant 0 : i32
    return %arg1, %c0_i32, %c0_i32_0 : i32, i32, i32
  }
  func.func @transform_4(%arg0: i32, %arg1: i32) -> (i32, i32, i32) {
    %c0_i32 = arith.constant 0 : i32
    %c0_i32_0 = arith.constant 0 : i32
    %c0_i32_1 = arith.constant 0 : i32
    return %arg1, %c0_i32, %c0_i32_0 : i32, i32, i32
  }
  func.func @transform_5(%arg0: i32, %arg1: i32) -> (i32, i32, i32, i32, i32) {
    %c0_i32 = arith.constant 0 : i32
    %c0_i32_0 = arith.constant 0 : i32
    %c0_i32_1 = arith.constant 0 : i32
    %c0_i32_2 = arith.constant 0 : i32
    return %arg0, %arg1, %c0_i32, %c0_i32_0, %c0_i32_1 : i32, i32, i32, i32, i32
  }
}

</mosaic_0001>

<llo_original>
// kernel: tpu_custom_call.1
$region0: #{tpu_custom_call.1}
  #allocation0 [shape = 'u32[]', space=smem, size = 0x4, offset = 0x4, fixed_abs, tag = 'smem constant byte address 0x4 - core index']
  #allocation1 [shape = 'u32[144,128]{1,0:T(1,128)}', space=vmem, size = 0x12000, scoped, tag = 'internal scratch']
  #allocation2 [shape = 'f32[8,32]{1,0:T(8,128)}', space=vmem, size = 0x1000, scoped, tag = 'scratch operand']
  %s0 = inlined_call_operand.vmem [shape: f32[1,2,8,8], index: 0, kind: input, shape index: {}]
  %s1 = inlined_call_operand.vmem [shape: f32[1,32], index: 1, kind: input, shape index: {}]
  %s2 = inlined_call_operand.vmem [shape: f32[2,8,32], index: 2, kind: input, shape index: {}]
  %s3 = inlined_call_operand.vmem [shape: f32[2,8,10], index: 3, kind: input, shape index: {}]
  %s4 = inlined_call_operand.vmem [shape: f32[16,10,32], index: 4, kind: input, shape index: {}]
  %s5 = inlined_call_operand.hbm [shape: f32[1,2,8,8,10], index: 5, kind: output, shape index: {}]
  %s6 = sld [smem:[#allocation0]]
  $region57: #{tpu_custom_call.1} parent=0
    _
  %s8 = ssub.s32 1, %s6
  %s9 = scalar_select 0, %s8, %s6
  $region1: #{tpu_custom_call.1} parent=0
    #allocation3 [shape = 'u8[65536]{0}', space=vmem, size = 0x10000, scoped, tag = 'output window, operand 0']
    #allocation4 [shape = 's32[2]{0}', space=sflag, size = 0x8, scoped, tag = 'scoped memory for tpu_custom_call.1']
    %10 = vsyncpa [#allocation4], 0
    %s11 = scalar_lea.sflag [#allocation4], 1
    %12 = vsyncpa %s11, 0
    loop: start=0, step=1, limit=4
    $region2: #{tpu_custom_call.1} parent=1 // loop_pre_header
      _
    $region3: #{tpu_custom_call.1} parent=1 // loop_header
      %s14 = sphi 0, %s18
      %p15 = scmp.ge.s32.totalorder %s14, 4
      %s21 = sphi 0, %s33
      %s22 = sphi 0, %s29
      %s23 = sphi 0, %s21
      %s24 = sphi 0, %s22
      %s25 = sphi 0, %s23
      %s26 = sphi 0, %s24
      %s38 = sphi 0, %s40
      %s41 = sphi 0, %s38
      %s42 = sphi 0, %s41
      %s58 = sphi 0, %s42
      %s62 = sphi 0, %s62
      %s64 = sphi 0, %s62
      %s65 = sphi 0, %s64
      %s79 = sphi 0, %s65
      %s85 = sphi 0, %s87
      %s88 = sphi 0, %s85
      %s89 = sphi 0, %s88
      %s105 = sphi 0, %s89
      %s111 = sphi 0, %s113
      %s114 = sphi 0, %s111
      %s115 = sphi 0, %s114
      %s131 = sphi 0, %s115
      %s137 = sphi 0, %s139
      %s140 = sphi 0, %s137
      %s141 = sphi 0, %s140
      %s157 = sphi 0, %s141
      %s165 = sphi 0, %s167
      %s168 = sphi 0, %s165
      %s169 = sphi 0, %s168
      %s185 = sphi 0, %s169
    $region4: #{tpu_custom_call.1} parent=1 // loop_header_branch
      %17 = sbr.rel (%p15) target = $region8
    $region5: #{tpu_custom_call.1} parent=1 // loop_body
      %s19 = ssub.s32 %s14, 1
      %s20 = ssub.s32 %s14, 2
      %s27 = sadd.s32 1, %s22
      %p28 = scmp.ge.s32.totalorder %s27, 2
      %s29 = scalar_select %p28, 0, %s27
      %s30 = sadd.s32 1, %s21
      %s31 = scalar_select %p28, %s30, %s21
      %p32 = scmp.ge.s32.totalorder %s31, 1
      %s33 = scalar_select %p32, 0, %s31
      %s34 = ssub.s32 %s21, %s33
      %s35 = ssub.s32 %s22, %s29
      %s36 = sor.u32 %s34, %s35
      %p37 = scmp.eq.s32.totalorder %s36, 0
      %s39 = sadd.s32 %s38, 1
      %s40 = scalar_select %p37, %s38, %s39
      %p43 = pneg %p37
      %p44 = scmp.eq.s32.totalorder %s14, 1
      %p45 = por %p43, %p44
      %p46 = scmp.ne.s32.totalorder %s38, %s41
      %p47 = scmp.eq.s32.totalorder %s14, 0
      %p48 = por %p46, %p47
      %p49 = scmp.ne.s32.totalorder %s38, %s41
      %p50 = scmp.eq.s32.totalorder %s19, 1
      %p51 = por %p49, %p50
      %p52 = scmp.ne.s32.totalorder %s41, %s42
      %p53 = scmp.eq.s32.totalorder %s19, 0
      %p54 = por %p52, %p53
      %p55 = scmp.ne.s32.totalorder %s41, %s42
      %p56 = scmp.eq.s32.totalorder %s20, 1
      %p57 = por %p55, %p56
      %p59 = scmp.ne.s32.totalorder %s42, %s58
      %p60 = scmp.eq.s32.totalorder %s20, 0
      %p61 = por %p59, %p60
      %s63 = sadd.s32 %s62, 1
      %p66 = scmp.eq.s32.totalorder %s14, 1
      %p67 = scmp.ne.s32.totalorder %s62, %s64
      %p68 = scmp.eq.s32.totalorder %s14, 0
      %p69 = por %p67, %p68
      %p70 = scmp.ne.s32.totalorder %s62, %s64
      %p71 = scmp.eq.s32.totalorder %s19, 1
      %p72 = por %p70, %p71
      %p73 = scmp.ne.s32.totalorder %s64, %s65
      %p74 = scmp.eq.s32.totalorder %s19, 0
      %p75 = por %p73, %p74
      %p76 = scmp.ne.s32.totalorder %s64, %s65
      %p77 = scmp.eq.s32.totalorder %s20, 1
      %p78 = por %p76, %p77
      %p80 = scmp.ne.s32.totalorder %s65, %s79
      %p81 = scmp.eq.s32.totalorder %s20, 0
      %p82 = por %p80, %p81
      %s83 = ssub.s32 %s22, %s29
      %p84 = scmp.eq.s32.totalorder %s83, 0
      %s86 = sadd.s32 %s85, 1
      %s87 = scalar_select %p84, %s85, %s86
      %p90 = pneg %p84
      %p91 = scmp.eq.s32.totalorder %s14, 1
      %p92 = por %p90, %p91
      %p93 = scmp.ne.s32.totalorder %s85, %s88
      %p94 = scmp.eq.s32.totalorder %s14, 0
      %p95 = por %p93, %p94
      %p96 = scmp.ne.s32.totalorder %s85, %s88
      %p97 = scmp.eq.s32.totalorder %s19, 1
      %p98 = por %p96, %p97
      %p99 = scmp.ne.s32.totalorder %s88, %s89
      %p100 = scmp.eq.s32.totalorder %s19, 0
      %p101 = por %p99, %p100
      %p102 = scmp.ne.s32.totalorder %s88, %s89
      %p103 = scmp.eq.s32.totalorder %s20, 1
      %p104 = por %p102, %p103
      %p106 = scmp.ne.s32.totalorder %s89, %s105
      %p107 = scmp.eq.s32.totalorder %s20, 0
      %p108 = por %p106, %p107
      %s109 = ssub.s32 %s22, %s29
      %p110 = scmp.eq.s32.totalorder %s109, 0
      %s112 = sadd.s32 %s111, 1
      %s113 = scalar_select %p110, %s111, %s112
      %p116 = pneg %p110
      %p117 = scmp.eq.s32.totalorder %s14, 1
      %p118 = por %p116, %p117
      %p119 = scmp.ne.s32.totalorder %s111, %s114
      %p120 = scmp.eq.s32.totalorder %s14, 0
      %p121 = por %p119, %p120
      %p122 = scmp.ne.s32.totalorder %s111, %s114
      %p123 = scmp.eq.s32.totalorder %s19, 1
      %p124 = por %p122, %p123
      %p125 = scmp.ne.s32.totalorder %s114, %s115
      %p126 = scmp.eq.s32.totalorder %s19, 0
      %p127 = por %p125, %p126
      %p128 = scmp.ne.s32.totalorder %s114, %s115
      %p129 = scmp.eq.s32.totalorder %s20, 1
      %p130 = por %p128, %p129
      %p132 = scmp.ne.s32.totalorder %s115, %s131
      %p133 = scmp.eq.s32.totalorder %s20, 0
      %p134 = por %p132, %p133
      %s135 = ssub.s32 %s22, %s29
      %p136 = scmp.eq.s32.totalorder %s135, 0
      %s138 = sadd.s32 %s137, 1
      %s139 = scalar_select %p136, %s137, %s138
      %p142 = pneg %p136
      %p143 = scmp.eq.s32.totalorder %s14, 1
      %p144 = por %p142, %p143
      %p145 = scmp.ne.s32.totalorder %s137, %s140
      %p146 = scmp.eq.s32.totalorder %s14, 0
      %p147 = por %p145, %p146
      %p148 = scmp.ne.s32.totalorder %s137, %s140
      %p149 = scmp.eq.s32.totalorder %s19, 1
      %p150 = por %p148, %p149
      %p151 = scmp.ne.s32.totalorder %s140, %s141
      %p152 = scmp.eq.s32.totalorder %s19, 0
      %p153 = por %p151, %p152
      %p154 = scmp.ne.s32.totalorder %s140, %s141
      %p155 = scmp.eq.s32.totalorder %s20, 1
      %p156 = por %p154, %p155
      %p158 = scmp.ne.s32.totalorder %s141, %s157
      %p159 = scmp.eq.s32.totalorder %s20, 0
      %p160 = por %p158, %p159
      %s161 = ssub.s32 %s21, %s33
      %s162 = ssub.s32 %s22, %s29
      %s163 = sor.u32 %s161, %s162
      %p164 = scmp.eq.s32.totalorder %s163, 0
      %s166 = sadd.s32 %s165, 1
      %s167 = scalar_select %p164, %s165, %s166
      %p170 = pneg %p164
      %p171 = scmp.eq.s32.totalorder %s14, 1
      %p172 = por %p170, %p171
      %p173 = scmp.ne.s32.totalorder %s165, %s168
      %p174 = scmp.eq.s32.totalorder %s14, 0
      %p175 = por %p173, %p174
      %p176 = scmp.ne.s32.totalorder %s165, %s168
      %p177 = scmp.eq.s32.totalorder %s19, 1
      %p178 = por %p176, %p177
      %p179 = scmp.ne.s32.totalorder %s168, %s169
      %p180 = scmp.eq.s32.totalorder %s19, 0
      %p181 = por %p179, %p180
      %p182 = scmp.ne.s32.totalorder %s168, %s169
      %p183 = scmp.eq.s32.totalorder %s20, 1
      %p184 = por %p182, %p183
      %p186 = scmp.ne.s32.totalorder %s169, %s185
      %p187 = scmp.eq.s32.totalorder %s20, 0
      %p188 = por %p186, %p187
      %p189 = scmp.le.s32.totalorder 1, %s14
      %p190 = scmp.lt.s32.totalorder %s14, 3
      %p191 = pnand %p189, %p190
      %p192 = pneg %p191
      // Predicated region
      $region9: #{tpu_custom_call.1} parent=5 // pred_check
        _
      $region10: #{tpu_custom_call.1} parent=5 // pred_check_branch
        %194 = sbr.rel (%p191) target = $region12
      $region11: #{tpu_custom_call.1} parent=5 // pred_region
        %s195 = ssub.s32 %s14, 1
        // Predicated region
        $region13: #{tpu_custom_call.1} parent=11 // pred_check
          %p196 = pneg %p75
        $region14: #{tpu_custom_call.1} parent=11 // pred_check_branch
          %198 = sbr.rel (%p196) target = $region16
        $region15: #{tpu_custom_call.1} parent=11 // pred_region
          _
        $region16: #{tpu_custom_call.1} parent=11 // pred_fallthru
          _
      $region12: #{tpu_custom_call.1} parent=5 // pred_fallthru
        _
      %p199 = scmp.lt.s32.totalorder %s14, 2
      // Predicated region
      $region17: #{tpu_custom_call.1} parent=5 // pred_check
        %p200 = pneg %p199
      $region18: #{tpu_custom_call.1} parent=5 // pred_check_branch
        %202 = sbr.rel (%p200) target = $region20
      $region19: #{tpu_custom_call.1} parent=5 // pred_region
        // Predicated region
        $region21: #{tpu_custom_call.1} parent=19 // pred_check
          %p203 = pneg %p48
        $region22: #{tpu_custom_call.1} parent=19 // pred_check_branch
          %205 = sbr.rel (%p203) target = $region24
        $region23: #{tpu_custom_call.1} parent=19 // pred_region
          %p206 = scmp.lt.s32.totalorder %s21, 0
          %s207 = scalar_select %p206, %s21, 0
          %p208 = scmp.lt.s32.totalorder %s22, 1
          %s209 = scalar_select %p208, %s22, 1
          %s210 = smul.addr %s207, 2
          %s211 = sadd.s32 %s209, %s210
          %s212 = smul.addr %s211, 8
          %s213 = scalar_lea.vmem %s0, %s212
        $region24: #{tpu_custom_call.1} parent=19 // pred_fallthru
          _
        // Predicated region
        $region25: #{tpu_custom_call.1} parent=19 // pred_check
          %p214 = pneg %p95
        $region26: #{tpu_custom_call.1} parent=19 // pred_check_branch
          %216 = sbr.rel (%p214) target = $region28
        $region27: #{tpu_custom_call.1} parent=19 // pred_region
          %p217 = scmp.lt.s32.totalorder %s22, 1
          %s218 = scalar_select %p217, %s22, 1
          %s219 = smul.addr %s218, 8
          %s220 = scalar_lea.vmem %s2, %s219
        $region28: #{tpu_custom_call.1} parent=19 // pred_fallthru
          _
        // Predicated region
        $region29: #{tpu_custom_call.1} parent=19 // pred_check
          %p221 = pneg %p121
        $region30: #{tpu_custom_call.1} parent=19 // pred_check_branch
          %223 = sbr.rel (%p221) target = $region32
        $region31: #{tpu_custom_call.1} parent=19 // pred_region
          %p224 = scmp.lt.s32.totalorder %s22, 1
          %s225 = scalar_select %p224, %s22, 1
          %s226 = smul.addr %s225, 8
          %s227 = scalar_lea.vmem %s3, %s226
        $region32: #{tpu_custom_call.1} parent=19 // pred_fallthru
          _
        // Predicated region
        $region33: #{tpu_custom_call.1} parent=19 // pred_check
          %p228 = pneg %p147
        $region34: #{tpu_custom_call.1} parent=19 // pred_check_branch
          %230 = sbr.rel (%p228) target = $region36
        $region35: #{tpu_custom_call.1} parent=19 // pred_region
          %s231 = smul.u32 8, %s22
          %p232 = scmp.lt.s32.totalorder %s231, 15
          %s233 = scalar_select %p232, %s231, 15
          %s234 = smul.addr %s233, 2
          %s235 = smul.addr %s234, 8
          %s236 = scalar_lea.vmem %s4, %s235
          %s237 = smul.u32 8, %s22
        $region36: #{tpu_custom_call.1} parent=19 // pred_fallthru
          _
      $region20: #{tpu_custom_call.1} parent=5 // pred_fallthru
        _
      %p238 = scmp.le.s32.totalorder 1, %s14
      %p239 = scmp.lt.s32.totalorder %s14, 3
      %p240 = pnand %p238, %p239
      %p241 = pneg %p240
      // Predicated region
      $region37: #{tpu_custom_call.1} parent=5 // pred_check
        _
      $region38: #{tpu_custom_call.1} parent=5 // pred_check_branch
        %243 = sbr.rel (%p240) target = $region40
      $region39: #{tpu_custom_call.1} parent=5 // pred_region
        %s244 = ssub.s32 %s14, 1
        %p245 = scmp.lt.s32.totalorder %s23, 0
        %s246 = scalar_select %p245, %s23, 0
        %p247 = scmp.lt.s32.totalorder %s24, 1
        %s248 = scalar_select %p247, %s24, 1
        %s249 = smul.addr %s246, 2
        %s250 = sadd.s32 %s248, %s249
        %s251 = smul.addr %s250, 8
        %s252 = scalar_lea.vmem %s0, %s251
        %p253 = pneg %p54
        %p254 = pneg %p51
        %p255 = pneg %p75
        %p256 = pneg %p72
        %p257 = scmp.lt.s32.totalorder %s24, 1
        %s258 = scalar_select %p257, %s24, 1
        %s259 = smul.addr %s258, 8
        %s260 = scalar_lea.vmem %s2, %s259
        %p261 = pneg %p101
        %p262 = pneg %p98
        %p263 = scmp.lt.s32.totalorder %s24, 1
        %s264 = scalar_select %p263, %s24, 1
        %s265 = smul.addr %s264, 8
        %s266 = scalar_lea.vmem %s3, %s265
        %p267 = pneg %p127
        %p268 = pneg %p124
        %s269 = smul.u32 8, %s24
        %p270 = scmp.lt.s32.totalorder %s269, 15
        %s271 = scalar_select %p270, %s269, 15
        %s272 = smul.addr %s271, 2
        %s273 = smul.addr %s272, 8
        %s274 = scalar_lea.vmem %s4, %s273
        %p275 = pneg %p153
        %p276 = pneg %p150
        %p277 = pneg %p181
        %p278 = pneg %p178
        %s279 = sand.u32 %s168, 1
        %s280 = scalar_lea.sflag [#allocation4], %s279
        %s281 = sand.u32 %s168, 1
        %s282 = smul.addr %s281, 64
        %s283 = scalar_lea.vmem [#allocation3], %s282
        %p284 = scmp.lt.s32.totalorder %s23, 0
        %s285 = scalar_select %p284, %s23, 0
        %p286 = scmp.lt.s32.totalorder %s24, 1
        %s287 = scalar_select %p286, %s24, 1
        %s288 = smul.addr %s285, 2
        %s289 = sadd.s32 %s287, %s288
        %s290 = smul.addr %s289, 8
        %s291 = scalar_lea.vmem %s0, %s290
        %p292 = scmp.lt.s32.totalorder %s24, 1
        %s293 = scalar_select %p292, %s24, 1
        %s294 = smul.addr %s293, 8
        %s295 = scalar_lea.vmem %s2, %s294
        %p296 = scmp.lt.s32.totalorder %s24, 1
        %s297 = scalar_select %p296, %s24, 1
        %s298 = smul.addr %s297, 8
        %s299 = scalar_lea.vmem %s3, %s298
        %s300 = smul.u32 8, %s24
        %p301 = scmp.lt.s32.totalorder %s300, 15
        %s302 = scalar_select %p301, %s300, 15
        %s303 = smul.addr %s302, 2
        %s304 = smul.addr %s303, 8
        %s305 = scalar_lea.vmem %s4, %s304
        %s306 = smul.u32 8, %s24
        %p307 = scmp.eq.s32.totalorder %s24, 0
        // Predicated region
        $region41: #{tpu_custom_call.1} parent=39 // pred_check
          %p308 = pneg %p307
        $region42: #{tpu_custom_call.1} parent=39 // pred_check_branch
          %310 = sbr.rel (%p308) target = $region44
        $region43: #{tpu_custom_call.1} parent=39 // pred_region
          %v311 = vld [vmem:[%s1] sm:$0x1]
          %v313 = vlaneseq
          %v314 = vshrl.u32 %v313, 7
          %v315 = vsub.s32 0, %v314
          %v316 = vrot.slane %v311, %v315
          %vm318 = vcmask 261120
          %319 = vst.msk [vmem:[#allocation2] sm:$0xff] %vm318, %v316
        $region44: #{tpu_custom_call.1} parent=39 // pred_fallthru
          _
        %v320 = vld [vmem:[#allocation2] sm:$0xff]
        %v321 = vld [vmem:[%s291] sm:$0xff]
        %v322 = vld [vmem:[%s295] sm:$0xff]
        %v323 = vld [vmem:[%s299] sm:$0xff]
        %v324 = vxor.u32 %v320, 2147483648
        %v325 = vmul.f32 %v324, 1.442695
        %v326 = vpow.pop %v325
        %v327 = vadd.f32 %v326, 1.0
        %v328 = vrcp.pop %v327
        %v329 = vmul.f32 1.0, %v328
        %v330 = vld [vmem:[%s305] sm:$0xff]
        %v331 = vld [vmem:[%s305 + $0x8] sm:$0x3]
        %v332 = vlaneseq
        %v333 = vshrl.u32 %v332, 7
        %v334 = vsub.s32 0, %v333
        %v335 = vrot.slane %v323, %v334
        %vm336 = vcmask 261120
        %v338 = vsel %vm336, %v329, 0
        %v341 = vsel %vm336, %v330, 0
        %v344 = vsel %vm336, %v331, 0
        %346 = vmatprep.subr.mxu0 0.0
        %347 = vmatpush1.xpose.msra.mxu0 %v341
        %348 = vmatprep.subr.mxu0 0.0
        %349 = vmatpush1.xpose.msra.mxu0 %v344
        %350 = vmatprep.subr.mxu0 0.0
        %351 = vmatpush1.xpose.msra.mxu0 0.0
        %352 = vmatprep.subr.mxu0 0.0
        %353 = vmatpush1.xpose.msra.mxu0 0.0
        %354 = vmatprep.subr.mxu0 0.0
        %355 = vmatpush1.xpose.msra.mxu0 0.0
        %356 = vmatprep.subr.mxu0 0.0
        %357 = vmatpush1.xpose.msra.mxu0 0.0
        %358 = vmatprep.subr.mxu0 0.0
        %359 = vmatpush1.xpose.msra.mxu0 0.0
        %360 = vmatprep.subr.mxu0 0.0
        %361 = vmatpush1.xpose.msra.mxu0 0.0
        %362 = vmatprep.subr.mxu0 0.0
        %363 = vmatpush1.xpose.msra.mxu0 0.0
        %364 = vmatprep.subr.mxu0 0.0
        %365 = vmatpush1.xpose.msra.mxu0 0.0
        %366 = vmatprep.subr.mxu0 0.0
        %367 = vmatpush1.xpose.msra.mxu0 0.0
        %368 = vmatprep.subr.mxu0 0.0
        %369 = vmatpush1.xpose.msra.mxu0 0.0
        %370 = vmatprep.subr.mxu0 0.0
        %371 = vmatpush1.xpose.msra.mxu0 0.0
        %372 = vmatprep.subr.mxu0 0.0
        %373 = vmatpush1.xpose.msra.mxu0 0.0
        %374 = vmatprep.subr.mxu0 0.0
        %375 = vmatpush1.xpose.msra.mxu0 0.0
        %376 = vmatprep.subr.mxu0 0.0
        %377 = vmatpush1.xpose.msra.mxu0 0.0
        %378 = vmatprep.subr.mxu0 0.0
        %379 = vmatpush1.xpose.msra.mxu0 0.0
        %380 = vmatprep.subr.mxu0 0.0
        %381 = vmatpush1.xpose.msra.mxu0 0.0
        %382 = vmatprep.subr.mxu0 0.0
        %383 = vmatpush1.xpose.msra.mxu0 0.0
        %384 = vmatprep.subr.mxu0 0.0
        %385 = vmatpush1.xpose.msra.mxu0 0.0
        %386 = vmatprep.subr.mxu0 0.0
        %387 = vmatpush1.xpose.msra.mxu0 0.0
        %388 = vmatprep.subr.mxu0 0.0
        %389 = vmatpush1.xpose.msra.mxu0 0.0
        %390 = vmatprep.subr.mxu0 0.0
        %391 = vmatpush1.xpose.msra.mxu0 0.0
        %392 = vmatprep.subr.mxu0 0.0
        %393 = vmatpush1.xpose.msra.mxu0 0.0
        %394 = vmatprep.subr.mxu0 0.0
        %395 = vmatpush1.xpose.msra.mxu0 0.0
        %396 = vmatprep.subr.mxu0 0.0
        %397 = vmatpush1.xpose.msra.mxu0 0.0
        %398 = vmatprep.subr.mxu0 0.0
        %399 = vmatpush1.xpose.msra.mxu0 0.0
        %400 = vmatprep.subr.mxu0 0.0
        %401 = vmatpush1.xpose.msra.mxu0 0.0
        %402 = vmatprep.subr.mxu0 0.0
        %403 = vmatpush1.xpose.msra.mxu0 0.0
        %404 = vmatprep.subr.mxu0 0.0
        %405 = vmatpush1.xpose.msra.mxu0 0.0
        %406 = vmatprep.subr.mxu0 0.0
        %407 = vmatpush1.xpose.msra.mxu0 0.0
        %408 = vmatprep.subr.mxu0 0.0
        %409 = vmatpush1.xpose.msra.mxu0 0.0
        %410 = vmatprep.mubr.f32.mxu0 0.0
        %411 = vmatmul.mubr.f32.gmra.mrb[0].mxu0 %v338
        %v412 = vpop.f32.mrb[0].mxu0
        %v413 = vadd.f32 %v335, %v412
        %v414 = vpop.f32.mrb[0].mxu0
        %415 = vdwg.mxu0
        %vm416 = vcmask 80896
        %v417 = vsel %vm416, %v413, -inf
        %418 = vmax.xlane.f32.xlu0 %v417
        %v419 = vpop.xlane.xlu0 %418
        %v420 = vsub.f32 %v413, %v419
        %v421 = vmul.f32 %v420, 1.442695
        %v422 = vpow.pop %v421
        %v423 = vsel %vm416, %v422, 0.0
        %424 = vadd.xlane.f32.xlu0 %v423
        %v425 = vpop.xlane.xlu0 %424
        %v426 = vrcp.pop %v425
        %v427 = vmul.f32 %v422, %v426
        %428 = vst.msk [vmem:[%s283] sm:$0xff] %vm416, %v427
        %430 = vset.pattern.permute.xlu0 0
        %431 = vperm.xlu0 %430, %v321
        %v432 = vpop.permute.xlu0 %431
        %v434 = vlaneseq
        %v435 = vshrl.u32 %v434, 7
        %v436 = vsub.s32 0, %v435
        %v437 = vrot.slane %v322, %v436
        %v438 = vmul.f32 %v432, %v437
        %v439 = vadd.f32 %v320, %v438
        %v440 = vxor.u32 %v439, 2147483648
        %v441 = vmul.f32 %v440, 1.442695
        %v442 = vpow.pop %v441
        %v443 = vadd.f32 %v442, 1.0
        %v444 = vrcp.pop %v443
        %v445 = vmul.f32 1.0, %v444
        %s446 = scalar_lea.vmem %s305, 16
        %v447 = vld [vmem:[%s446] sm:$0xff]
        %v448 = vld [vmem:[%s446 + $0x8] sm:$0x3]
        %v449 = vlaneseq
        %v450 = vshrl.u32 %v449, 7
        %v451 = vsub.s32 1, %v450
        %v452 = vrot.slane %v323, %v451
        %v454 = vsel %vm336, %v445, 0
        %v457 = vsel %vm336, %v447, 0
        %v460 = vsel %vm336, %v448, 0
        %462 = vmatprep.subr.mxu0 0.0
        %463 = vmatpush1.xpose.msra.mxu0 %v457
        %464 = vmatprep.subr.mxu0 0.0
        %465 = vmatpush1.xpose.msra.mxu0 %v460
        %466 = vmatprep.subr.mxu0 0.0
        %467 = vmatpush1.xpose.msra.mxu0 0.0
        %468 = vmatprep.subr.mxu0 0.0
        %469 = vmatpush1.xpose.msra.mxu0 0.0
        %470 = vmatprep.subr.mxu0 0.0
        %471 = vmatpush1.xpose.msra.mxu0 0.0
        %472 = vmatprep.subr.mxu0 0.0
        %473 = vmatpush1.xpose.msra.mxu0 0.0
        %474 = vmatprep.subr.mxu0 0.0
        %475 = vmatpush1.xpose.msra.mxu0 0.0
        %476 = vmatprep.subr.mxu0 0.0
        %477 = vmatpush1.xpose.msra.mxu0 0.0
        %478 = vmatprep.subr.mxu0 0.0
        %479 = vmatpush1.xpose.msra.mxu0 0.0
        %480 = vmatprep.subr.mxu0 0.0
        %481 = vmatpush1.xpose.msra.mxu0 0.0
        %482 = vmatprep.subr.mxu0 0.0
        %483 = vmatpush1.xpose.msra.mxu0 0.0
        %484 = vmatprep.subr.mxu0 0.0
        %485 = vmatpush1.xpose.msra.mxu0 0.0
        %486 = vmatprep.subr.mxu0 0.0
        %487 = vmatpush1.xpose.msra.mxu0 0.0
        %488 = vmatprep.subr.mxu0 0.0
        %489 = vmatpush1.xpose.msra.mxu0 0.0
        %490 = vmatprep.subr.mxu0 0.0
        %491 = vmatpush1.xpose.msra.mxu0 0.0
        %492 = vmatprep.subr.mxu0 0.0
        %493 = vmatpush1.xpose.msra.mxu0 0.0
        %494 = vmatprep.subr.mxu0 0.0
        %495 = vmatpush1.xpose.msra.mxu0 0.0
        %496 = vmatprep.subr.mxu0 0.0
        %497 = vmatpush1.xpose.msra.mxu0 0.0
        %498 = vmatprep.subr.mxu0 0.0
        %499 = vmatpush1.xpose.msra.mxu0 0.0
        %500 = vmatprep.subr.mxu0 0.0
        %501 = vmatpush1.xpose.msra.mxu0 0.0
        %502 = vmatprep.subr.mxu0 0.0
        %503 = vmatpush1.xpose.msra.mxu0 0.0
        %504 = vmatprep.subr.mxu0 0.0
        %505 = vmatpush1.xpose.msra.mxu0 0.0
        %506 = vmatprep.subr.mxu0 0.0
        %507 = vmatpush1.xpose.msra.mxu0 0.0
        %508 = vmatprep.subr.mxu0 0.0
        %509 = vmatpush1.xpose.msra.mxu0 0.0
        %510 = vmatprep.subr.mxu0 0.0
        %511 = vmatpush1.xpose.msra.mxu0 0.0
        %512 = vmatprep.subr.mxu0 0.0
        %513 = vmatpush1.xpose.msra.mxu0 0.0
        %514 = vmatprep.subr.mxu0 0.0
        %515 = vmatpush1.xpose.msra.mxu0 0.0
        %516 = vmatprep.subr.mxu0 0.0
        %517 = vmatpush1.xpose.msra.mxu0 0.0
        %518 = vmatprep.subr.mxu0 0.0
        %519 = vmatpush1.xpose.msra.mxu0 0.0
        %520 = vmatprep.subr.mxu0 0.0
        %521 = vmatpush1.xpose.msra.mxu0 0.0
        %522 = vmatprep.subr.mxu0 0.0
        %523 = vmatpush1.xpose.msra.mxu0 0.0
        %524 = vmatprep.subr.mxu0 0.0
        %525 = vmatpush1.xpose.msra.mxu0 0.0
        %526 = vmatprep.mubr.f32.mxu0 0.0
        %527 = vmatmul.mubr.f32.gmra.mrb[0].mxu0 %v454
        %v528 = vpop.f32.mrb[0].mxu0
        %v529 = vadd.f32 %v452, %v528
        %v530 = vpop.f32.mrb[0].mxu0
        %531 = vdwg.mxu0
        %v532 = vsel %vm416, %v529, -inf
        %533 = vmax.xlane.f32.xlu0 %v532
        %v534 = vpop.xlane.xlu0 %533
        %v535 = vsub.f32 %v529, %v534
        %v536 = vmul.f32 %v535, 1.442695
        %v537 = vpow.pop %v536
        %v538 = vsel %vm416, %v537, 0.0
        %539 = vadd.xlane.f32.xlu0 %v538
        %v540 = vpop.xlane.xlu0 %539
        %v541 = vrcp.pop %v540
        %v542 = vmul.f32 %v537, %v541
        %s543 = scalar_lea.vmem %s283, 8 [#allocation3]
        %544 = vst.msk [vmem:[%s543] sm:$0xff] %vm416, %v542
        %545 = vset.pattern.permute.xlu0 1
        %546 = vperm.xlu0 %545, %v321
        %v547 = vpop.permute.xlu0 %546
        %v549 = vlaneseq
        %v550 = vshrl.u32 %v549, 7
        %v551 = vsub.s32 1, %v550
        %v552 = vrot.slane %v322, %v551
        %v553 = vmul.f32 %v547, %v552
        %v554 = vadd.f32 %v439, %v553
        %v555 = vxor.u32 %v554, 2147483648
        %v556 = vmul.f32 %v555, 1.442695
        %v557 = vpow.pop %v556
        %v558 = vadd.f32 %v557, 1.0
        %v559 = vrcp.pop %v558
        %v560 = vmul.f32 1.0, %v559
        %s561 = scalar_lea.vmem %s305, 32
        %v562 = vld [vmem:[%s561] sm:$0xff]
        %v563 = vld [vmem:[%s561 + $0x8] sm:$0x3]
        %v564 = vlaneseq
        %v565 = vshrl.u32 %v564, 7
        %v566 = vsub.s32 2, %v565
        %v567 = vrot.slane %v323, %v566
        %v569 = vsel %vm336, %v560, 0
        %v572 = vsel %vm336, %v562, 0
        %v575 = vsel %vm336, %v563, 0
        %577 = vmatprep.subr.mxu0 0.0
        %578 = vmatpush1.xpose.msra.mxu0 %v572
        %579 = vmatprep.subr.mxu0 0.0
        %580 = vmatpush1.xpose.msra.mxu0 %v575
        %581 = vmatprep.subr.mxu0 0.0
        %582 = vmatpush1.xpose.msra.mxu0 0.0
        %583 = vmatprep.subr.mxu0 0.0
        %584 = vmatpush1.xpose.msra.mxu0 0.0
        %585 = vmatprep.subr.mxu0 0.0
        %586 = vmatpush1.xpose.msra.mxu0 0.0
        %587 = vmatprep.subr.mxu0 0.0
        %588 = vmatpush1.xpose.msra.mxu0 0.0
        %589 = vmatprep.subr.mxu0 0.0
        %590 = vmatpush1.xpose.msra.mxu0 0.0
        %591 = vmatprep.subr.mxu0 0.0
        %592 = vmatpush1.xpose.msra.mxu0 0.0
        %593 = vmatprep.subr.mxu0 0.0
        %594 = vmatpush1.xpose.msra.mxu0 0.0
        %595 = vmatprep.subr.mxu0 0.0
        %596 = vmatpush1.xpose.msra.mxu0 0.0
        %597 = vmatprep.subr.mxu0 0.0
        %598 = vmatpush1.xpose.msra.mxu0 0.0
        %599 = vmatprep.subr.mxu0 0.0
        %600 = vmatpush1.xpose.msra.mxu0 0.0
        %601 = vmatprep.subr.mxu0 0.0
        %602 = vmatpush1.xpose.msra.mxu0 0.0
        %603 = vmatprep.subr.mxu0 0.0
        %604 = vmatpush1.xpose.msra.mxu0 0.0
        %605 = vmatprep.subr.mxu0 0.0
        %606 = vmatpush1.xpose.msra.mxu0 0.0
        %607 = vmatprep.subr.mxu0 0.0
        %608 = vmatpush1.xpose.msra.mxu0 0.0
        %609 = vmatprep.subr.mxu0 0.0
        %610 = vmatpush1.xpose.msra.mxu0 0.0
        %611 = vmatprep.subr.mxu0 0.0
        %612 = vmatpush1.xpose.msra.mxu0 0.0
        %613 = vmatprep.subr.mxu0 0.0
        %614 = vmatpush1.xpose.msra.mxu0 0.0
        %615 = vmatprep.subr.mxu0 0.0
        %616 = vmatpush1.xpose.msra.mxu0 0.0
        %617 = vmatprep.subr.mxu0 0.0
        %618 = vmatpush1.xpose.msra.mxu0 0.0
        %619 = vmatprep.subr.mxu0 0.0
        %620 = vmatpush1.xpose.msra.mxu0 0.0
        %621 = vmatprep.subr.mxu0 0.0
        %622 = vmatpush1.xpose.msra.mxu0 0.0
        %623 = vmatprep.subr.mxu0 0.0
        %624 = vmatpush1.xpose.msra.mxu0 0.0
        %625 = vmatprep.subr.mxu0 0.0
        %626 = vmatpush1.xpose.msra.mxu0 0.0
        %627 = vmatprep.subr.mxu0 0.0
        %628 = vmatpush1.xpose.msra.mxu0 0.0
        %629 = vmatprep.subr.mxu0 0.0
        %630 = vmatpush1.xpose.msra.mxu0 0.0
        %631 = vmatprep.subr.mxu0 0.0
        %632 = vmatpush1.xpose.msra.mxu0 0.0
        %633 = vmatprep.subr.mxu0 0.0
        %634 = vmatpush1.xpose.msra.mxu0 0.0
        %635 = vmatprep.subr.mxu0 0.0
        %636 = vmatpush1.xpose.msra.mxu0 0.0
        %637 = vmatprep.subr.mxu0 0.0
        %638 = vmatpush1.xpose.msra.mxu0 0.0
        %639 = vmatprep.subr.mxu0 0.0
        %640 = vmatpush1.xpose.msra.mxu0 0.0
        %641 = vmatprep.mubr.f32.mxu0 0.0
        %642 = vmatmul.mubr.f32.gmra.mrb[0].mxu0 %v569
        %v643 = vpop.f32.mrb[0].mxu0
        %v644 = vadd.f32 %v567, %v643
        %v645 = vpop.f32.mrb[0].mxu0
        %646 = vdwg.mxu0
        %v647 = vsel %vm416, %v644, -inf
        %648 = vmax.xlane.f32.xlu0 %v647
        %v649 = vpop.xlane.xlu0 %648
        %v650 = vsub.f32 %v644, %v649
        %v651 = vmul.f32 %v650, 1.442695
        %v652 = vpow.pop %v651
        %v653 = vsel %vm416, %v652, 0.0
        %654 = vadd.xlane.f32.xlu0 %v653
        %v655 = vpop.xlane.xlu0 %654
        %v656 = vrcp.pop %v655
        %v657 = vmul.f32 %v652, %v656
        %s658 = scalar_lea.vmem %s283, 16 [#allocation3]
        %659 = vst.msk [vmem:[%s658] sm:$0xff] %vm416, %v657
        %660 = vset.pattern.permute.xlu0 2
        %661 = vperm.xlu0 %660, %v321
        %v662 = vpop.permute.xlu0 %661
        %v664 = vlaneseq
        %v665 = vshrl.u32 %v664, 7
        %v666 = vsub.s32 2, %v665
        %v667 = vrot.slane %v322, %v666
        %v668 = vmul.f32 %v662, %v667
        %v669 = vadd.f32 %v554, %v668
        %v670 = vxor.u32 %v669, 2147483648
        %v671 = vmul.f32 %v670, 1.442695
        %v672 = vpow.pop %v671
        %v673 = vadd.f32 %v672, 1.0
        %v674 = vrcp.pop %v673
        %v675 = vmul.f32 1.0, %v674
        %s676 = scalar_lea.vmem %s305, 48
        %v677 = vld [vmem:[%s676] sm:$0xff]
        %v678 = vld [vmem:[%s676 + $0x8] sm:$0x3]
        %v679 = vlaneseq
        %v680 = vshrl.u32 %v679, 7
        %v681 = vsub.s32 3, %v680
        %v682 = vrot.slane %v323, %v681
        %v684 = vsel %vm336, %v675, 0
        %v687 = vsel %vm336, %v677, 0
        %v690 = vsel %vm336, %v678, 0
        %692 = vmatprep.subr.mxu0 0.0
        %693 = vmatpush1.xpose.msra.mxu0 %v687
        %694 = vmatprep.subr.mxu0 0.0
        %695 = vmatpush1.xpose.msra.mxu0 %v690
        %696 = vmatprep.subr.mxu0 0.0
        %697 = vmatpush1.xpose.msra.mxu0 0.0
        %698 = vmatprep.subr.mxu0 0.0
        %699 = vmatpush1.xpose.msra.mxu0 0.0
        %700 = vmatprep.subr.mxu0 0.0
        %701 = vmatpush1.xpose.msra.mxu0 0.0
        %702 = vmatprep.subr.mxu0 0.0
        %703 = vmatpush1.xpose.msra.mxu0 0.0
        %704 = vmatprep.subr.mxu0 0.0
        %705 = vmatpush1.xpose.msra.mxu0 0.0
        %706 = vmatprep.subr.mxu0 0.0
        %707 = vmatpush1.xpose.msra.mxu0 0.0
        %708 = vmatprep.subr.mxu0 0.0
        %709 = vmatpush1.xpose.msra.mxu0 0.0
        %710 = vmatprep.subr.mxu0 0.0
        %711 = vmatpush1.xpose.msra.mxu0 0.0
        %712 = vmatprep.subr.mxu0 0.0
        %713 = vmatpush1.xpose.msra.mxu0 0.0
        %714 = vmatprep.subr.mxu0 0.0
        %715 = vmatpush1.xpose.msra.mxu0 0.0
        %716 = vmatprep.subr.mxu0 0.0
        %717 = vmatpush1.xpose.msra.mxu0 0.0
        %718 = vmatprep.subr.mxu0 0.0
        %719 = vmatpush1.xpose.msra.mxu0 0.0
        %720 = vmatprep.subr.mxu0 0.0
        %721 = vmatpush1.xpose.msra.mxu0 0.0
        %722 = vmatprep.subr.mxu0 0.0
        %723 = vmatpush1.xpose.msra.mxu0 0.0
        %724 = vmatprep.subr.mxu0 0.0
        %725 = vmatpush1.xpose.msra.mxu0 0.0
        %726 = vmatprep.subr.mxu0 0.0
        %727 = vmatpush1.xpose.msra.mxu0 0.0
        %728 = vmatprep.subr.mxu0 0.0
        %729 = vmatpush1.xpose.msra.mxu0 0.0
        %730 = vmatprep.subr.mxu0 0.0
        %731 = vmatpush1.xpose.msra.mxu0 0.0
        %732 = vmatprep.subr.mxu0 0.0
        %733 = vmatpush1.xpose.msra.mxu0 0.0
        %734 = vmatprep.subr.mxu0 0.0
        %735 = vmatpush1.xpose.msra.mxu0 0.0
        %736 = vmatprep.subr.mxu0 0.0
        %737 = vmatpush1.xpose.msra.mxu0 0.0
        %738 = vmatprep.subr.mxu0 0.0
        %739 = vmatpush1.xpose.msra.mxu0 0.0
        %740 = vmatprep.subr.mxu0 0.0
        %741 = vmatpush1.xpose.msra.mxu0 0.0
        %742 = vmatprep.subr.mxu0 0.0
        %743 = vmatpush1.xpose.msra.mxu0 0.0
        %744 = vmatprep.subr.mxu0 0.0
        %745 = vmatpush1.xpose.msra.mxu0 0.0
        %746 = vmatprep.subr.mxu0 0.0
        %747 = vmatpush1.xpose.msra.mxu0 0.0
        %748 = vmatprep.subr.mxu0 0.0
        %749 = vmatpush1.xpose.msra.mxu0 0.0
        %750 = vmatprep.subr.mxu0 0.0
        %751 = vmatpush1.xpose.msra.mxu0 0.0
        %752 = vmatprep.subr.mxu0 0.0
        %753 = vmatpush1.xpose.msra.mxu0 0.0
        %754 = vmatprep.subr.mxu0 0.0
        %755 = vmatpush1.xpose.msra.mxu0 0.0
        %756 = vmatprep.mubr.f32.mxu0 0.0
        %757 = vmatmul.mubr.f32.gmra.mrb[0].mxu0 %v684
        %v758 = vpop.f32.mrb[0].mxu0
        %v759 = vadd.f32 %v682, %v758
        %v760 = vpop.f32.mrb[0].mxu0
        %761 = vdwg.mxu0
        %v762 = vsel %vm416, %v759, -inf
        %763 = vmax.xlane.f32.xlu0 %v762
        %v764 = vpop.xlane.xlu0 %763
        %v765 = vsub.f32 %v759, %v764
        %v766 = vmul.f32 %v765, 1.442695
        %v767 = vpow.pop %v766
        %v768 = vsel %vm416, %v767, 0.0
        %769 = vadd.xlane.f32.xlu0 %v768
        %v770 = vpop.xlane.xlu0 %769
        %v771 = vrcp.pop %v770
        %v772 = vmul.f32 %v767, %v771
        %s773 = scalar_lea.vmem %s283, 24 [#allocation3]
        %774 = vst.msk [vmem:[%s773] sm:$0xff] %vm416, %v772
        %775 = vset.pattern.permute.xlu0 3
        %776 = vperm.xlu0 %775, %v321
        %v777 = vpop.permute.xlu0 %776
        %v779 = vlaneseq
        %v780 = vshrl.u32 %v779, 7
        %v781 = vsub.s32 3, %v780
        %v782 = vrot.slane %v322, %v781
        %v783 = vmul.f32 %v777, %v782
        %v784 = vadd.f32 %v669, %v783
        %v785 = vxor.u32 %v784, 2147483648
        %v786 = vmul.f32 %v785, 1.442695
        %v787 = vpow.pop %v786
        %v788 = vadd.f32 %v787, 1.0
        %v789 = vrcp.pop %v788
        %v790 = vmul.f32 1.0, %v789
        %s791 = scalar_lea.vmem %s305, 64
        %v792 = vld [vmem:[%s791] sm:$0xff]
        %v793 = vld [vmem:[%s791 + $0x8] sm:$0x3]
        %v794 = vlaneseq
        %v795 = vshrl.u32 %v794, 7
        %v796 = vsub.s32 4, %v795
        %v797 = vrot.slane %v323, %v796
        %v799 = vsel %vm336, %v790, 0
        %v802 = vsel %vm336, %v792, 0
        %v805 = vsel %vm336, %v793, 0
        %807 = vmatprep.subr.mxu0 0.0
        %808 = vmatpush1.xpose.msra.mxu0 %v802
        %809 = vmatprep.subr.mxu0 0.0
        %810 = vmatpush1.xpose.msra.mxu0 %v805
        %811 = vmatprep.subr.mxu0 0.0
        %812 = vmatpush1.xpose.msra.mxu0 0.0
        %813 = vmatprep.subr.mxu0 0.0
        %814 = vmatpush1.xpose.msra.mxu0 0.0
        %815 = vmatprep.subr.mxu0 0.0
        %816 = vmatpush1.xpose.msra.mxu0 0.0
        %817 = vmatprep.subr.mxu0 0.0
        %818 = vmatpush1.xpose.msra.mxu0 0.0
        %819 = vmatprep.subr.mxu0 0.0
        %820 = vmatpush1.xpose.msra.mxu0 0.0
        %821 = vmatprep.subr.mxu0 0.0
        %822 = vmatpush1.xpose.msra.mxu0 0.0
        %823 = vmatprep.subr.mxu0 0.0
        %824 = vmatpush1.xpose.msra.mxu0 0.0
        %825 = vmatprep.subr.mxu0 0.0
        %826 = vmatpush1.xpose.msra.mxu0 0.0
        %827 = vmatprep.subr.mxu0 0.0
        %828 = vmatpush1.xpose.msra.mxu0 0.0
        %829 = vmatprep.subr.mxu0 0.0
        %830 = vmatpush1.xpose.msra.mxu0 0.0
        %831 = vmatprep.subr.mxu0 0.0
        %832 = vmatpush1.xpose.msra.mxu0 0.0
        %833 = vmatprep.subr.mxu0 0.0
        %834 = vmatpush1.xpose.msra.mxu0 0.0
        %835 = vmatprep.subr.mxu0 0.0
        %836 = vmatpush1.xpose.msra.mxu0 0.0
        %837 = vmatprep.subr.mxu0 0.0
        %838 = vmatpush1.xpose.msra.mxu0 0.0
        %839 = vmatprep.subr.mxu0 0.0
        %840 = vmatpush1.xpose.msra.mxu0 0.0
        %841 = vmatprep.subr.mxu0 0.0
        %842 = vmatpush1.xpose.msra.mxu0 0.0
        %843 = vmatprep.subr.mxu0 0.0
        %844 = vmatpush1.xpose.msra.mxu0 0.0
        %845 = vmatprep.subr.mxu0 0.0
        %846 = vmatpush1.xpose.msra.mxu0 0.0
        %847 = vmatprep.subr.mxu0 0.0
        %848 = vmatpush1.xpose.msra.mxu0 0.0
        %849 = vmatprep.subr.mxu0 0.0
        %850 = vmatpush1.xpose.msra.mxu0 0.0
        %851 = vmatprep.subr.mxu0 0.0
        %852 = vmatpush1.xpose.msra.mxu0 0.0
        %853 = vmatprep.subr.mxu0 0.0
        %854 = vmatpush1.xpose.msra.mxu0 0.0
        %855 = vmatprep.subr.mxu0 0.0
        %856 = vmatpush1.xpose.msra.mxu0 0.0
        %857 = vmatprep.subr.mxu0 0.0
        %858 = vmatpush1.xpose.msra.mxu0 0.0
        %859 = vmatprep.subr.mxu0 0.0
        %860 = vmatpush1.xpose.msra.mxu0 0.0
        %861 = vmatprep.subr.mxu0 0.0
        %862 = vmatpush1.xpose.msra.mxu0 0.0
        %863 = vmatprep.subr.mxu0 0.0
        %864 = vmatpush1.xpose.msra.mxu0 0.0
        %865 = vmatprep.subr.mxu0 0.0
        %866 = vmatpush1.xpose.msra.mxu0 0.0
        %867 = vmatprep.subr.mxu0 0.0
        %868 = vmatpush1.xpose.msra.mxu0 0.0
        %869 = vmatprep.subr.mxu0 0.0
        %870 = vmatpush1.xpose.msra.mxu0 0.0
        %871 = vmatprep.mubr.f32.mxu0 0.0
        %872 = vmatmul.mubr.f32.gmra.mrb[0].mxu0 %v799
        %v873 = vpop.f32.mrb[0].mxu0
        %v874 = vadd.f32 %v797, %v873
        %v875 = vpop.f32.mrb[0].mxu0
        %876 = vdwg.mxu0
        %v877 = vsel %vm416, %v874, -inf
        %878 = vmax.xlane.f32.xlu0 %v877
        %v879 = vpop.xlane.xlu0 %878
        %v880 = vsub.f32 %v874, %v879
        %v881 = vmul.f32 %v880, 1.442695
        %v882 = vpow.pop %v881
        %v883 = vsel %vm416, %v882, 0.0
        %884 = vadd.xlane.f32.xlu0 %v883
        %v885 = vpop.xlane.xlu0 %884
        %v886 = vrcp.pop %v885
        %v887 = vmul.f32 %v882, %v886
        %s888 = scalar_lea.vmem %s283, 32 [#allocation3]
        %889 = vst.msk [vmem:[%s888] sm:$0xff] %vm416, %v887
        %890 = vset.pattern.permute.xlu0 4
        %891 = vperm.xlu0 %890, %v321
        %v892 = vpop.permute.xlu0 %891
        %v894 = vlaneseq
        %v895 = vshrl.u32 %v894, 7
        %v896 = vsub.s32 4, %v895
        %v897 = vrot.slane %v322, %v896
        %v898 = vmul.f32 %v892, %v897
        %v899 = vadd.f32 %v784, %v898
        %v900 = vxor.u32 %v899, 2147483648
        %v901 = vmul.f32 %v900, 1.442695
        %v902 = vpow.pop %v901
        %v903 = vadd.f32 %v902, 1.0
        %v904 = vrcp.pop %v903
        %v905 = vmul.f32 1.0, %v904
        %s906 = scalar_lea.vmem %s305, 80
        %v907 = vld [vmem:[%s906] sm:$0xff]
        %v908 = vld [vmem:[%s906 + $0x8] sm:$0x3]
        %v909 = vlaneseq
        %v910 = vshrl.u32 %v909, 7
        %v911 = vsub.s32 5, %v910
        %v912 = vrot.slane %v323, %v911
        %v914 = vsel %vm336, %v905, 0
        %v917 = vsel %vm336, %v907, 0
        %v920 = vsel %vm336, %v908, 0
        %922 = vmatprep.subr.mxu0 0.0
        %923 = vmatpush1.xpose.msra.mxu0 %v917
        %924 = vmatprep.subr.mxu0 0.0
        %925 = vmatpush1.xpose.msra.mxu0 %v920
        %926 = vmatprep.subr.mxu0 0.0
        %927 = vmatpush1.xpose.msra.mxu0 0.0
        %928 = vmatprep.subr.mxu0 0.0
        %929 = vmatpush1.xpose.msra.mxu0 0.0
        %930 = vmatprep.subr.mxu0 0.0
        %931 = vmatpush1.xpose.msra.mxu0 0.0
        %932 = vmatprep.subr.mxu0 0.0
        %933 = vmatpush1.xpose.msra.mxu0 0.0
        %934 = vmatprep.subr.mxu0 0.0
        %935 = vmatpush1.xpose.msra.mxu0 0.0
        %936 = vmatprep.subr.mxu0 0.0
        %937 = vmatpush1.xpose.msra.mxu0 0.0
        %938 = vmatprep.subr.mxu0 0.0
        %939 = vmatpush1.xpose.msra.mxu0 0.0
        %940 = vmatprep.subr.mxu0 0.0
        %941 = vmatpush1.xpose.msra.mxu0 0.0
        %942 = vmatprep.subr.mxu0 0.0
        %943 = vmatpush1.xpose.msra.mxu0 0.0
        %944 = vmatprep.subr.mxu0 0.0
        %945 = vmatpush1.xpose.msra.mxu0 0.0
        %946 = vmatprep.subr.mxu0 0.0
        %947 = vmatpush1.xpose.msra.mxu0 0.0
        %948 = vmatprep.subr.mxu0 0.0
        %949 = vmatpush1.xpose.msra.mxu0 0.0
        %950 = vmatprep.subr.mxu0 0.0
        %951 = vmatpush1.xpose.msra.mxu0 0.0
        %952 = vmatprep.subr.mxu0 0.0
        %953 = vmatpush1.xpose.msra.mxu0 0.0
        %954 = vmatprep.subr.mxu0 0.0
        %955 = vmatpush1.xpose.msra.mxu0 0.0
        %956 = vmatprep.subr.mxu0 0.0
        %957 = vmatpush1.xpose.msra.mxu0 0.0
        %958 = vmatprep.subr.mxu0 0.0
        %959 = vmatpush1.xpose.msra.mxu0 0.0
        %960 = vmatprep.subr.mxu0 0.0
        %961 = vmatpush1.xpose.msra.mxu0 0.0
        %962 = vmatprep.subr.mxu0 0.0
        %963 = vmatpush1.xpose.msra.mxu0 0.0
        %964 = vmatprep.subr.mxu0 0.0
        %965 = vmatpush1.xpose.msra.mxu0 0.0
        %966 = vmatprep.subr.mxu0 0.0
        %967 = vmatpush1.xpose.msra.mxu0 0.0
        %968 = vmatprep.subr.mxu0 0.0
        %969 = vmatpush1.xpose.msra.mxu0 0.0
        %970 = vmatprep.subr.mxu0 0.0
        %971 = vmatpush1.xpose.msra.mxu0 0.0
        %972 = vmatprep.subr.mxu0 0.0
        %973 = vmatpush1.xpose.msra.mxu0 0.0
        %974 = vmatprep.subr.mxu0 0.0
        %975 = vmatpush1.xpose.msra.mxu0 0.0
        %976 = vmatprep.subr.mxu0 0.0
        %977 = vmatpush1.xpose.msra.mxu0 0.0
        %978 = vmatprep.subr.mxu0 0.0
        %979 = vmatpush1.xpose.msra.mxu0 0.0
        %980 = vmatprep.subr.mxu0 0.0
        %981 = vmatpush1.xpose.msra.mxu0 0.0
        %982 = vmatprep.subr.mxu0 0.0
        %983 = vmatpush1.xpose.msra.mxu0 0.0
        %984 = vmatprep.subr.mxu0 0.0
        %985 = vmatpush1.xpose.msra.mxu0 0.0
        %986 = vmatprep.mubr.f32.mxu0 0.0
        %987 = vmatmul.mubr.f32.gmra.mrb[0].mxu0 %v914
        %v988 = vpop.f32.mrb[0].mxu0
        %v989 = vadd.f32 %v912, %v988
        %v990 = vpop.f32.mrb[0].mxu0
        %991 = vdwg.mxu0
        %v992 = vsel %vm416, %v989, -inf
        %993 = vmax.xlane.f32.xlu0 %v992
        %v994 = vpop.xlane.xlu0 %993
        %v995 = vsub.f32 %v989, %v994
        %v996 = vmul.f32 %v995, 1.442695
        %v997 = vpow.pop %v996
        %v998 = vsel %vm416, %v997, 0.0
        %999 = vadd.xlane.f32.xlu0 %v998
        %v1000 = vpop.xlane.xlu0 %999
        %v1001 = vrcp.pop %v1000
        %v1002 = vmul.f32 %v997, %v1001
        %s1003 = scalar_lea.vmem %s283, 40 [#allocation3]
        %1004 = vst.msk [vmem:[%s1003] sm:$0xff] %vm416, %v1002
        %1005 = vset.pattern.permute.xlu0 5
        %1006 = vperm.xlu0 %1005, %v321
        %v1007 = vpop.permute.xlu0 %1006
        %v1009 = vlaneseq
        %v1010 = vshrl.u32 %v1009, 7
        %v1011 = vsub.s32 5, %v1010
        %v1012 = vrot.slane %v322, %v1011
        %v1013 = vmul.f32 %v1007, %v1012
        %v1014 = vadd.f32 %v899, %v1013
        %v1015 = vxor.u32 %v1014, 2147483648
        %v1016 = vmul.f32 %v1015, 1.442695
        %v1017 = vpow.pop %v1016
        %v1018 = vadd.f32 %v1017, 1.0
        %v1019 = vrcp.pop %v1018
        %v1020 = vmul.f32 1.0, %v1019
        %s1021 = scalar_lea.vmem %s305, 96
        %v1022 = vld [vmem:[%s1021] sm:$0xff]
        %v1023 = vld [vmem:[%s1021 + $0x8] sm:$0x3]
        %v1024 = vlaneseq
        %v1025 = vshrl.u32 %v1024, 7
        %v1026 = vsub.s32 6, %v1025
        %v1027 = vrot.slane %v323, %v1026
        %v1029 = vsel %vm336, %v1020, 0
        %v1032 = vsel %vm336, %v1022, 0
        %v1035 = vsel %vm336, %v1023, 0
        %1037 = vmatprep.subr.mxu0 0.0
        %1038 = vmatpush1.xpose.msra.mxu0 %v1032
        %1039 = vmatprep.subr.mxu0 0.0
        %1040 = vmatpush1.xpose.msra.mxu0 %v1035
        %1041 = vmatprep.subr.mxu0 0.0
        %1042 = vmatpush1.xpose.msra.mxu0 0.0
        %1043 = vmatprep.subr.mxu0 0.0
        %1044 = vmatpush1.xpose.msra.mxu0 0.0
        %1045 = vmatprep.subr.mxu0 0.0
        %1046 = vmatpush1.xpose.msra.mxu0 0.0
        %1047 = vmatprep.subr.mxu0 0.0
        %1048 = vmatpush1.xpose.msra.mxu0 0.0
        %1049 = vmatprep.subr.mxu0 0.0
        %1050 = vmatpush1.xpose.msra.mxu0 0.0
        %1051 = vmatprep.subr.mxu0 0.0
        %1052 = vmatpush1.xpose.msra.mxu0 0.0
        %1053 = vmatprep.subr.mxu0 0.0
        %1054 = vmatpush1.xpose.msra.mxu0 0.0
        %1055 = vmatprep.subr.mxu0 0.0
        %1056 = vmatpush1.xpose.msra.mxu0 0.0
        %1057 = vmatprep.subr.mxu0 0.0
        %1058 = vmatpush1.xpose.msra.mxu0 0.0
        %1059 = vmatprep.subr.mxu0 0.0
        %1060 = vmatpush1.xpose.msra.mxu0 0.0
        %1061 = vmatprep.subr.mxu0 0.0
        %1062 = vmatpush1.xpose.msra.mxu0 0.0
        %1063 = vmatprep.subr.mxu0 0.0
        %1064 = vmatpush1.xpose.msra.mxu0 0.0
        %1065 = vmatprep.subr.mxu0 0.0
        %1066 = vmatpush1.xpose.msra.mxu0 0.0
        %1067 = vmatprep.subr.mxu0 0.0
        %1068 = vmatpush1.xpose.msra.mxu0 0.0
        %1069 = vmatprep.subr.mxu0 0.0
        %1070 = vmatpush1.xpose.msra.mxu0 0.0
        %1071 = vmatprep.subr.mxu0 0.0
        %1072 = vmatpush1.xpose.msra.mxu0 0.0
        %1073 = vmatprep.subr.mxu0 0.0
        %1074 = vmatpush1.xpose.msra.mxu0 0.0
        %1075 = vmatprep.subr.mxu0 0.0
        %1076 = vmatpush1.xpose.msra.mxu0 0.0
        %1077 = vmatprep.subr.mxu0 0.0
        %1078 = vmatpush1.xpose.msra.mxu0 0.0
        %1079 = vmatprep.subr.mxu0 0.0
        %1080 = vmatpush1.xpose.msra.mxu0 0.0
        %1081 = vmatprep.subr.mxu0 0.0
        %1082 = vmatpush1.xpose.msra.mxu0 0.0
        %1083 = vmatprep.subr.mxu0 0.0
        %1084 = vmatpush1.xpose.msra.mxu0 0.0
        %1085 = vmatprep.subr.mxu0 0.0
        %1086 = vmatpush1.xpose.msra.mxu0 0.0
        %1087 = vmatprep.subr.mxu0 0.0
        %1088 = vmatpush1.xpose.msra.mxu0 0.0
        %1089 = vmatprep.subr.mxu0 0.0
        %1090 = vmatpush1.xpose.msra.mxu0 0.0
        %1091 = vmatprep.subr.mxu0 0.0
        %1092 = vmatpush1.xpose.msra.mxu0 0.0
        %1093 = vmatprep.subr.mxu0 0.0
        %1094 = vmatpush1.xpose.msra.mxu0 0.0
        %1095 = vmatprep.subr.mxu0 0.0
        %1096 = vmatpush1.xpose.msra.mxu0 0.0
        %1097 = vmatprep.subr.mxu0 0.0
        %1098 = vmatpush1.xpose.msra.mxu0 0.0
        %1099 = vmatprep.subr.mxu0 0.0
        %1100 = vmatpush1.xpose.msra.mxu0 0.0
        %1101 = vmatprep.mubr.f32.mxu0 0.0
        %1102 = vmatmul.mubr.f32.gmra.mrb[0].mxu0 %v1029
        %v1103 = vpop.f32.mrb[0].mxu0
        %v1104 = vadd.f32 %v1027, %v1103
        %v1105 = vpop.f32.mrb[0].mxu0
        %1106 = vdwg.mxu0
        %v1107 = vsel %vm416, %v1104, -inf
        %1108 = vmax.xlane.f32.xlu0 %v1107
        %v1109 = vpop.xlane.xlu0 %1108
        %v1110 = vsub.f32 %v1104, %v1109
        %v1111 = vmul.f32 %v1110, 1.442695
        %v1112 = vpow.pop %v1111
        %v1113 = vsel %vm416, %v1112, 0.0
        %1114 = vadd.xlane.f32.xlu0 %v1113
        %v1115 = vpop.xlane.xlu0 %1114
        %v1116 = vrcp.pop %v1115
        %v1117 = vmul.f32 %v1112, %v1116
        %s1118 = scalar_lea.vmem %s283, 48 [#allocation3]
        %1119 = vst.msk [vmem:[%s1118] sm:$0xff] %vm416, %v1117
        %1120 = vset.pattern.permute.xlu0 6
        %1121 = vperm.xlu0 %1120, %v321
        %v1122 = vpop.permute.xlu0 %1121
        %v1124 = vlaneseq
        %v1125 = vshrl.u32 %v1124, 7
        %v1126 = vsub.s32 6, %v1125
        %v1127 = vrot.slane %v322, %v1126
        %v1128 = vmul.f32 %v1122, %v1127
        %v1129 = vadd.f32 %v1014, %v1128
        %v1130 = vxor.u32 %v1129, 2147483648
        %v1131 = vmul.f32 %v1130, 1.442695
        %v1132 = vpow.pop %v1131
        %v1133 = vadd.f32 %v1132, 1.0
        %v1134 = vrcp.pop %v1133
        %v1135 = vmul.f32 1.0, %v1134
        %s1136 = scalar_lea.vmem %s305, 112
        %v1137 = vld [vmem:[%s1136] sm:$0xff]
        %v1138 = vld [vmem:[%s1136 + $0x8] sm:$0x3]
        %v1139 = vlaneseq
        %v1140 = vshrl.u32 %v1139, 7
        %v1141 = vsub.s32 7, %v1140
        %v1142 = vrot.slane %v323, %v1141
        %v1144 = vsel %vm336, %v1135, 0
        %v1147 = vsel %vm336, %v1137, 0
        %v1150 = vsel %vm336, %v1138, 0
        %1152 = vmatprep.subr.mxu0 0.0
        %1153 = vmatpush1.xpose.msra.mxu0 %v1147
        %1154 = vmatprep.subr.mxu0 0.0
        %1155 = vmatpush1.xpose.msra.mxu0 %v1150
        %1156 = vmatprep.subr.mxu0 0.0
        %1157 = vmatpush1.xpose.msra.mxu0 0.0
        %1158 = vmatprep.subr.mxu0 0.0
        %1159 = vmatpush1.xpose.msra.mxu0 0.0
        %1160 = vmatprep.subr.mxu0 0.0
        %1161 = vmatpush1.xpose.msra.mxu0 0.0
        %1162 = vmatprep.subr.mxu0 0.0
        %1163 = vmatpush1.xpose.msra.mxu0 0.0
        %1164 = vmatprep.subr.mxu0 0.0
        %1165 = vmatpush1.xpose.msra.mxu0 0.0
        %1166 = vmatprep.subr.mxu0 0.0
        %1167 = vmatpush1.xpose.msra.mxu0 0.0
        %1168 = vmatprep.subr.mxu0 0.0
        %1169 = vmatpush1.xpose.msra.mxu0 0.0
        %1170 = vmatprep.subr.mxu0 0.0
        %1171 = vmatpush1.xpose.msra.mxu0 0.0
        %1172 = vmatprep.subr.mxu0 0.0
        %1173 = vmatpush1.xpose.msra.mxu0 0.0
        %1174 = vmatprep.subr.mxu0 0.0
        %1175 = vmatpush1.xpose.msra.mxu0 0.0
        %1176 = vmatprep.subr.mxu0 0.0
        %1177 = vmatpush1.xpose.msra.mxu0 0.0
        %1178 = vmatprep.subr.mxu0 0.0
        %1179 = vmatpush1.xpose.msra.mxu0 0.0
        %1180 = vmatprep.subr.mxu0 0.0
        %1181 = vmatpush1.xpose.msra.mxu0 0.0
        %1182 = vmatprep.subr.mxu0 0.0
        %1183 = vmatpush1.xpose.msra.mxu0 0.0
        %1184 = vmatprep.subr.mxu0 0.0
        %1185 = vmatpush1.xpose.msra.mxu0 0.0
        %1186 = vmatprep.subr.mxu0 0.0
        %1187 = vmatpush1.xpose.msra.mxu0 0.0
        %1188 = vmatprep.subr.mxu0 0.0
        %1189 = vmatpush1.xpose.msra.mxu0 0.0
        %1190 = vmatprep.subr.mxu0 0.0
        %1191 = vmatpush1.xpose.msra.mxu0 0.0
        %1192 = vmatprep.subr.mxu0 0.0
        %1193 = vmatpush1.xpose.msra.mxu0 0.0
        %1194 = vmatprep.subr.mxu0 0.0
        %1195 = vmatpush1.xpose.msra.mxu0 0.0
        %1196 = vmatprep.subr.mxu0 0.0
        %1197 = vmatpush1.xpose.msra.mxu0 0.0
        %1198 = vmatprep.subr.mxu0 0.0
        %1199 = vmatpush1.xpose.msra.mxu0 0.0
        %1200 = vmatprep.subr.mxu0 0.0
        %1201 = vmatpush1.xpose.msra.mxu0 0.0
        %1202 = vmatprep.subr.mxu0 0.0
        %1203 = vmatpush1.xpose.msra.mxu0 0.0
        %1204 = vmatprep.subr.mxu0 0.0
        %1205 = vmatpush1.xpose.msra.mxu0 0.0
        %1206 = vmatprep.subr.mxu0 0.0
        %1207 = vmatpush1.xpose.msra.mxu0 0.0
        %1208 = vmatprep.subr.mxu0 0.0
        %1209 = vmatpush1.xpose.msra.mxu0 0.0
        %1210 = vmatprep.subr.mxu0 0.0
        %1211 = vmatpush1.xpose.msra.mxu0 0.0
        %1212 = vmatprep.subr.mxu0 0.0
        %1213 = vmatpush1.xpose.msra.mxu0 0.0
        %1214 = vmatprep.subr.mxu0 0.0
        %1215 = vmatpush1.xpose.msra.mxu0 0.0
        %1216 = vmatprep.mubr.f32.mxu0 0.0
        %1217 = vmatmul.mubr.f32.gmra.mrb[0].mxu0 %v1144
        %v1218 = vpop.f32.mrb[0].mxu0
        %v1219 = vadd.f32 %v1142, %v1218
        %v1220 = vpop.f32.mrb[0].mxu0
        %1221 = vdwg.mxu0
        %v1222 = vsel %vm416, %v1219, -inf
        %1223 = vmax.xlane.f32.xlu0 %v1222
        %v1224 = vpop.xlane.xlu0 %1223
        %v1225 = vsub.f32 %v1219, %v1224
        %v1226 = vmul.f32 %v1225, 1.442695
        %v1227 = vpow.pop %v1226
        %v1228 = vsel %vm416, %v1227, 0.0
        %1229 = vadd.xlane.f32.xlu0 %v1228
        %v1230 = vpop.xlane.xlu0 %1229
        %v1231 = vrcp.pop %v1230
        %v1232 = vmul.f32 %v1227, %v1231
        %s1233 = scalar_lea.vmem %s283, 56 [#allocation3]
        %1234 = vst.msk [vmem:[%s1233] sm:$0xff] %vm416, %v1232
        %1235 = vset.pattern.permute.xlu0 7
        %1236 = vperm.xlu0 %1235, %v321
        %v1237 = vpop.permute.xlu0 %1236
        %v1239 = vlaneseq
        %v1240 = vshrl.u32 %v1239, 7
        %v1241 = vsub.s32 7, %v1240
        %v1242 = vrot.slane %v322, %v1241
        %v1243 = vmul.f32 %v1237, %v1242
        %v1244 = vadd.f32 %v1129, %v1243
        %1245 = vst.msk [vmem:[#allocation2] sm:$0xff] %vm336, %v1244
        %s1246 = sand.u32 %s168, 1
        %s1247 = scalar_lea.sflag [#allocation4], %s1246
        %s1248 = sand.u32 %s168, 1
        %s1249 = smul.addr %s1248, 64
        %s1250 = scalar_lea.vmem [#allocation3], %s1249
        // Predicated region
        $region45: #{tpu_custom_call.1} parent=39 // pred_check
          %p1251 = pneg %p178
        $region46: #{tpu_custom_call.1} parent=39 // pred_check_branch
          %1253 = sbr.rel (%p1251) target = $region48
        $region47: #{tpu_custom_call.1} parent=39 // pred_region
          %s1255 = ssub.s32 1024, 1024
          %1256 = vsyncadd %s1247, %s1255
          %s1257 = smul.addr %s24, 8
          %s1258 = smul.addr %s23, 16
          %s1259 = sadd.s32 %s1257, %s1258
          %s1260 = smul.addr %s1259, 128
          %s1261 = scalar_lea.hbm %s5, %s1260
          %s1262 = sshll.u32 %s1250, 4
          %s1263 = int_to_ptr.vmem [resolvable:$true] %s1262
          %1268 = dma.vmem_to_hbm [thread:$0]  %s1263, 1024, %s1261, %s1247, 128, 128, 8
        $region48: #{tpu_custom_call.1} parent=39 // pred_fallthru
          _
      $region40: #{tpu_custom_call.1} parent=5 // pred_fallthru
        _
      %p1269 = scmp.le.s32.totalorder 2, %s14
      // Predicated region
      $region49: #{tpu_custom_call.1} parent=5 // pred_check
        %p1270 = pneg %p1269
      $region50: #{tpu_custom_call.1} parent=5 // pred_check_branch
        %1272 = sbr.rel (%p1270) target = $region52
      $region51: #{tpu_custom_call.1} parent=5 // pred_region
        %s1273 = ssub.s32 %s14, 2
        // Predicated region
        $region53: #{tpu_custom_call.1} parent=51 // pred_check
          %p1274 = pneg %p184
        $region54: #{tpu_custom_call.1} parent=51 // pred_check_branch
          %1276 = sbr.rel (%p1274) target = $region56
        $region55: #{tpu_custom_call.1} parent=51 // pred_region
          %s1277 = sand.u32 %s169, 1
          %s1278 = scalar_lea.sflag [#allocation4], %s1277
          %s1279 = sand.u32 %s169, 1
          %s1280 = smul.addr %s1279, 64
          %s1281 = scalar_lea.vmem [#allocation3], %s1280
          %1282 = dma.done %s1278, 1024
        $region56: #{tpu_custom_call.1} parent=51 // pred_fallthru
          _
      $region52: #{tpu_custom_call.1} parent=5 // pred_fallthru
        _
    $region6: #{tpu_custom_call.1} parent=1 // loop_footer
      %s18 = sadd.s32 1, %s14
    $region7: #{tpu_custom_call.1} parent=1 // loop_footer_branch
      %13 = sbr.rel target = $region3
    $region8: #{tpu_custom_call.1} parent=1 // loop_exit
      _
    %1283 = vsyncpa [#allocation4], 1
    %s1284 = scalar_lea.sflag [#allocation4], 1
    %1285 = vsyncpa %s1284, 1

</llo_original>
